<compile_context>
chip_gen: v7x
topology: tpu7x:2x2x1
jax: 0.10.0
libtpu: 0.0.40
codegen_flags: <defaults>
</compile_context>

<pallas_src>
import jax
import jax.numpy as jnp
from jax.experimental import pallas as pl
from jax.experimental.pallas import tpu as pltpu
import numpy as np


def dnet_block_kernel(x_ref, w1_ref, b1_ref, wd_ref, b2_ref, w3_ref, b3_ref,
                      sew1_ref, sew2_ref, o_ref):
    tb, _, L = x_ref.shape

    # Depthwise 'same' zero-padding edge masks, built once per grid step (VPU iota+cmp).
    col = jax.lax.broadcasted_iota(jnp.int32, (1, L), 1)
    lmask = (col != 0).astype(jnp.float32)        # zero contribution from h[-1]
    rmask = (col != L - 1).astype(jnp.float32)    # zero contribution from h[L]

    w1 = w1_ref[...]          # (H, C)  bf16, BN1 scale folded
    wd = wd_ref[...]          # (H, 3)  f32,  BN2 scale folded
    w3 = w3_ref[...]          # (C, H)  bf16, BN3 scale folded
    b1 = b1_ref[...]          # (H, 1)
    b2 = b2_ref[...]          # (H, 1)
    b3 = b3_ref[...]          # (C, 1)
    sew1 = sew1_ref[...]      # (C//r, C)
    sew2 = sew2_ref[...]      # (C, C//r)

    # Short static loop over the batch elements in this block (tb is small, <= 8).
    for b in range(tb):
        # --- pointwise conv 1 (+ folded BN scale) + shift + ReLU; bf16 MXU, f32 acc ---
        h = jnp.dot(w1, x_ref[b].astype(jnp.bfloat16),
                    preferred_element_type=jnp.float32)            # (H, L)
        h = jnp.maximum(h + b1, 0.0)

        # --- depthwise conv k=3, 'same' zero padding, groups=H (BN scale folded in taps) ---
        h_l = pltpu.roll(h, 1, axis=1) * lmask                     # h[l-1], zero at l=0
        h_r = pltpu.roll(h, L - 1, axis=1) * rmask                 # h[l+1], zero at l=L-1
        h = wd[:, 0:1] * h_l + wd[:, 1:2] * h + wd[:, 2:3] * h_r
        h = jnp.maximum(h + b2, 0.0)

        # --- pointwise conv 2 back to C channels + shift + ReLU ---
        h = jnp.dot(w3, h.astype(jnp.bfloat16),
                    preferred_element_type=jnp.float32)            # (C, L)
        h = jnp.maximum(h + b3, 0.0)

        # --- SE block: global mean pool (lane reduce), Linear->ReLU->Linear->Sigmoid, gate ---
        s = jnp.mean(h, axis=1, keepdims=True)                     # (C, 1), exact f32
        e = jnp.maximum(
            jnp.dot(sew1, s, preferred_element_type=jnp.float32,
                    precision=jax.lax.Precision.HIGHEST), 0.0)     # (C//r, 1)
        g = jax.nn.sigmoid(
            jnp.dot(sew2, e, preferred_element_type=jnp.float32,
                    precision=jax.lax.Precision.HIGHEST))          # (C, 1)

        # Dropout(p=0) is identity; residual add (cat=False) against the re-read f32 input.
        o_ref[b] = (h * g + x_ref[b]).astype(o_ref.dtype)


def _vmem_capacity_bytes():
    try:
        info = pltpu.get_tpu_info()
        return int(getattr(info, "vmem_capacity_bytes", 64 * 1024 * 1024))
    except Exception:
        return 64 * 1024 * 1024          # conservative: v7x per-TensorCore VMEM


def _pick_tb(B, C, L):
    """Batch elements per grid step + vmem limit, generation-aware.

    Accounts for 2x double-buffered input AND output blocks; prefers >= 4 grid steps
    (>= 2 per TensorCore on v7x megacore); caps the per-step activation block at ~4 MiB.
    """
    vmem = _vmem_capacity_bytes()
    vmem_limit = min(int(vmem * 3 // 4), 100 * 1024 * 1024)   # ~48 MiB v7x, ~96 MiB v5e/v6e
    budget = vmem // 3                                        # headroom: weights, temps, scratch
    target = min(4 * 1024 * 1024, budget // 4)                # per-input-block byte target

    min_steps = 4 if B >= 4 else (2 if B >= 2 else 1)
    blk_bytes = C * L * 4
    tb = 1
    for d in range(1, min(B, 8) + 1):                         # cap unrolled in-kernel loop at 8
        if B % d:
            continue
        if B // d < min_steps:
            break
        if d * blk_bytes > target:
            continue
        if 4 * d * blk_bytes > budget:                        # 2x dbl-buf * (in + out)
            continue
        tb = d
    return tb, vmem_limit


def dnet_conv_block(x, params):
    B, C, L = x.shape
    (w1, s1, b1, wd, s2, b2, w3, s3, b3, sew1, sew2) = params
    H = w1.shape[0]
    Cr = sew1.shape[0]

    tb, vmem_limit = _pick_tb(B, C, L)
    grid = (B // tb,)

    # Fold BN scales into the conv weights once per call (shifts stay as in-kernel biases).
    w1f = (w1 * s1).astype(jnp.bfloat16)       # (H, C)
    wdf = (wd * s2).astype(jnp.float32)        # (H, 3)
    w3f = (w3 * s3).astype(jnp.bfloat16)       # (C, H)

    def const_spec(a):
        return pl.BlockSpec(a.shape, lambda i, _nd=a.ndim: (0,) * _nd)

    consts = (w1f, b1, wdf, b2, w3f, b3, sew1, sew2)
    in_specs = [pl.BlockSpec((tb, C, L), lambda i: (i, 0, 0))] + [const_spec(a) for a in consts]
    out_specs = pl.BlockSpec((tb, C, L), lambda i: (i, 0, 0))

    flops = (2 * B * L * C * H          # 1x1 conv in
             + 8 * B * L * H            # depthwise k=3 (+edge masks)
             + 2 * B * L * H * C        # 1x1 conv out
             + B * L * C                # SE mean pool
             + 4 * B * C * Cr           # SE excitation matvecs
             + 3 * B * C * L)           # gate apply + residual
    bytes_accessed = (2 * B * C * L * 4
                      + (w1f.size + w3f.size) * 2
                      + (wdf.size + b1.size + b2.size + b3.size
                         + sew1.size + sew2.size) * 4)

    return pl.pallas_call(
        dnet_block_kernel,
        out_shape=jax.ShapeDtypeStruct((B, C, L), x.dtype),
        grid_spec=pltpu.PrefetchScalarGridSpec(
            num_scalar_prefetch=0,
            grid=grid,
            in_specs=in_specs,
            out_specs=out_specs,
        ),
        compiler_params=pltpu.CompilerParams(
            dimension_semantics=("parallel",),
            vmem_limit_bytes=vmem_limit,
        ),
        cost_estimate=pl.CostEstimate(flops=flops, transcendentals=B * C,
                                      bytes_accessed=bytes_accessed),
    )(x, *consts)


def reference_forward(x, params, matmul_dtype=jnp.float32):
    """Pure-JAX reference of the module forward (inference-mode BN).

    matmul_dtype=jnp.bfloat16 mirrors the kernel's MXU precision policy for the two
    pointwise convs; the SE path is f32/HIGHEST in both kernel and reference.
    """
    (w1, s1, b1, wd, s2, b2, w3, s3, b3, sew1, sew2) = params
    hp = jax.lax.Precision.HIGHEST
    w1f = (w1 * s1).astype(matmul_dtype)
    wdf = wd * s2
    w3f = (w3 * s3).astype(matmul_dtype)

    h = jnp.einsum('oc,bcl->bol', w1f, x.astype(matmul_dtype),
                   preferred_element_type=jnp.float32, precision=hp)
    h = jax.nn.relu(h + b1[None])
    hpad = jnp.pad(h, ((0, 0), (0, 0), (1, 1)))
    h = (wdf[None, :, 0:1] * hpad[:, :, :-2] +
         wdf[None, :, 1:2] * hpad[:, :, 1:-1] +
         wdf[None, :, 2:3] * hpad[:, :, 2:])
    h = jax.nn.relu(h + b2[None])
    h = jnp.einsum('oc,bcl->bol', w3f, h.astype(matmul_dtype),
                   preferred_element_type=jnp.float32, precision=hp)
    h = jax.nn.relu(h + b3[None])
    s = jnp.mean(h, axis=2)                                      # (B, C)
    e = jax.nn.relu(jnp.dot(s, sew1.T, precision=hp))
    g = jax.nn.sigmoid(jnp.dot(e, sew2.T, precision=hp))
    return h * g[:, :, None] + x


def make_params(key, in_channels, depth_multiplier=1.0, r=8, eps=1e-5):
    C = in_channels
    H = int(in_channels * depth_multiplier)
    Cr = C // r
    ks = jax.random.split(key, 16)

    def bn_fold(kg, kb, km, kv, n):
        gamma = 0.5 + jax.random.uniform(kg, (n,), jnp.float32)
        beta = 0.1 * jax.random.normal(kb, (n,), jnp.float32)
        rmean = 0.1 * jax.random.normal(km, (n,), jnp.float32)
        rvar = 0.5 + jax.random.uniform(kv, (n,), jnp.float32)
        scale = gamma / jnp.sqrt(rvar + eps)
        shift = beta - rmean * scale
        return scale.reshape(n, 1), shift.reshape(n, 1)

    w1 = 0.2 * jax.random.normal(ks[0], (H, C), jnp.float32)     # Conv1d(C->H, k=1), squeezed
    s1, b1 = bn_fold(ks[1], ks[2], ks[3], ks[4], H)
    wd = 0.2 * jax.random.normal(ks[5], (H, 3), jnp.float32)     # depthwise Conv1d(H, k=3, groups=H)
    s2, b2 = bn_fold(ks[6], ks[7], ks[8], ks[9], H)
    w3 = 0.2 * jax.random.normal(ks[10], (C, H), jnp.float32)    # Conv1d(H->C, k=1)
    s3, b3 = bn_fold(ks[11], ks[12], ks[13], ks[14], C)
    k_se1, k_se2 = jax.random.split(ks[15])
    sew1 = 0.2 * jax.random.normal(k_se1, (Cr, C), jnp.float32)  # Linear(C, C//r, bias=False)
    sew2 = 0.2 * jax.random.normal(k_se2, (C, Cr), jnp.float32)  # Linear(C//r, C, bias=False)
    return (w1, s1, b1, wd, s2, b2, w3, s3, b3, sew1, sew2)


if __name__ == "__main__":
    key = jax.random.PRNGKey(0)
    k_x, k_p = jax.random.split(key)

    # in_channels=16 so SE hidden = 16 // 8 = 2; L=256 keeps the lane dim a 256-multiple
    # (v6e/v7x MXU tile width); B=8 -> grid of >= 4 steps (2 per v7x TensorCore).
    B, C, L = 8, 16, 256
    x = jax.random.normal(k_x, (B, C, L), jnp.float32)
    params = make_params(k_p, in_channels=C, depth_multiplier=1.0)

    out = dnet_conv_block(x, params)
    out = jax.block_until_ready(out)

    # (1) precision-matched reference (same bf16 MXU operands for the convs) -> tight tolerance
    ref_bf16 = reference_forward(x, params, matmul_dtype=jnp.bfloat16)
    np.testing.assert_allclose(np.asarray(out), np.asarray(ref_bf16), rtol=1e-3, atol=1e-3)

    # (2) pure-f32 module semantics -> loose tolerance bounding the bf16 matmul error
    ref_f32 = reference_forward(x, params, matmul_dtype=jnp.float32)
    np.testing.assert_allclose(np.asarray(out), np.asarray(ref_f32), rtol=5e-2, atol=5e-2)

    print("KERNEL_OK")
</pallas_src>

<mosaic_0001>
module attributes {stable_mosaic.version = 11 : i64} {
  func.func @dnet_block_kernel(%arg0: i32, %arg1: memref<2x16x256xf32, #tpu.memory_space<vmem>>, %arg2: memref<16x16xbf16, #tpu.memory_space<vmem>>, %arg3: memref<16x1xf32, #tpu.memory_space<vmem>>, %arg4: memref<16x3xf32, #tpu.memory_space<vmem>>, %arg5: memref<16x1xf32, #tpu.memory_space<vmem>>, %arg6: memref<16x16xbf16, #tpu.memory_space<vmem>>, %arg7: memref<16x1xf32, #tpu.memory_space<vmem>>, %arg8: memref<2x16xf32, #tpu.memory_space<vmem>>, %arg9: memref<16x2xf32, #tpu.memory_space<vmem>>, %arg10: memref<2x16x256xf32, #tpu.memory_space<vmem>>) attributes {dimension_semantics = [#tpu.dimension_semantics<parallel>], iteration_bounds = array<i64: 4>, scalar_prefetch = 0 : i64, scratch_operands = 0 : i64, tpu.core_type = #tpu.core_type<tc>, window_params = [{transform_indices = @transform_0, window_bounds = array<i64: 2, 16, 256>}, {pipeline_mode = #tpu.pipeline_mode<synchronous>, transform_indices = @transform_1, window_bounds = array<i64: 16, 16>}, {pipeline_mode = #tpu.pipeline_mode<synchronous>, transform_indices = @transform_2, window_bounds = array<i64: 16, 1>}, {pipeline_mode = #tpu.pipeline_mode<synchronous>, transform_indices = @transform_3, window_bounds = array<i64: 16, 3>}, {pipeline_mode = #tpu.pipeline_mode<synchronous>, transform_indices = @transform_4, window_bounds = array<i64: 16, 1>}, {pipeline_mode = #tpu.pipeline_mode<synchronous>, transform_indices = @transform_5, window_bounds = array<i64: 16, 16>}, {pipeline_mode = #tpu.pipeline_mode<synchronous>, transform_indices = @transform_6, window_bounds = array<i64: 16, 1>}, {pipeline_mode = #tpu.pipeline_mode<synchronous>, transform_indices = @transform_7, window_bounds = array<i64: 2, 16>}, {pipeline_mode = #tpu.pipeline_mode<synchronous>, transform_indices = @transform_8, window_bounds = array<i64: 16, 2>}, {transform_indices = @transform_9, window_bounds = array<i64: 2, 16, 256>}]} {
    %0 = tpu.iota {dimensions = array<i32: 1>} : vector<1x256xi32>
    %c0_i32 = arith.constant 0 : i32
    %1 = vector.broadcast %c0_i32 : i32 to vector<1x256xi32>
    %2 = arith.cmpi ne, %0, %1 : vector<1x256xi32>
    %3 = arith.extui %2 : vector<1x256xi1> to vector<1x256xi32>
    %4 = arith.sitofp %3 : vector<1x256xi32> to vector<1x256xf32>
    %c255_i32 = arith.constant 255 : i32
    %5 = vector.broadcast %c255_i32 : i32 to vector<1x256xi32>
    %6 = arith.cmpi ne, %0, %5 : vector<1x256xi32>
    %7 = arith.extui %6 : vector<1x256xi1> to vector<1x256xi32>
    %8 = arith.sitofp %7 : vector<1x256xi32> to vector<1x256xf32>
    %c0 = arith.constant 0 : index
    %c0_0 = arith.constant 0 : index
    %9 = vector.load %arg2[%c0, %c0_0] : memref<16x16xbf16, #tpu.memory_space<vmem>>, vector<16x16xbf16>
    %c0_1 = arith.constant 0 : index
    %c0_2 = arith.constant 0 : index
    %10 = vector.load %arg4[%c0_1, %c0_2] : memref<16x3xf32, #tpu.memory_space<vmem>>, vector<16x3xf32>
    %c0_3 = arith.constant 0 : index
    %c0_4 = arith.constant 0 : index
    %11 = vector.load %arg6[%c0_3, %c0_4] : memref<16x16xbf16, #tpu.memory_space<vmem>>, vector<16x16xbf16>
    %c0_5 = arith.constant 0 : index
    %c0_6 = arith.constant 0 : index
    %12 = vector.load %arg3[%c0_5, %c0_6] : memref<16x1xf32, #tpu.memory_space<vmem>>, vector<16x1xf32>
    %c0_7 = arith.constant 0 : index
    %c0_8 = arith.constant 0 : index
    %13 = vector.load %arg5[%c0_7, %c0_8] : memref<16x1xf32, #tpu.memory_space<vmem>>, vector<16x1xf32>
    %c0_9 = arith.constant 0 : index
    %c0_10 = arith.constant 0 : index
    %14 = vector.load %arg7[%c0_9, %c0_10] : memref<16x1xf32, #tpu.memory_space<vmem>>, vector<16x1xf32>
    %c0_11 = arith.constant 0 : index
    %c0_12 = arith.constant 0 : index
    %15 = vector.load %arg8[%c0_11, %c0_12] : memref<2x16xf32, #tpu.memory_space<vmem>>, vector<2x16xf32>
    %c0_13 = arith.constant 0 : index
    %c0_14 = arith.constant 0 : index
    %16 = vector.load %arg9[%c0_13, %c0_14] : memref<16x2xf32, #tpu.memory_space<vmem>>, vector<16x2xf32>
    %c0_15 = arith.constant 0 : index
    %c0_16 = arith.constant 0 : index
    %c0_17 = arith.constant 0 : index
    %17 = vector.load %arg1[%c0_15, %c0_16, %c0_17] : memref<2x16x256xf32, #tpu.memory_space<vmem>>, vector<1x16x256xf32>
    %18 = vector.shape_cast %17 : vector<1x16x256xf32> to vector<16x256xf32>
    %19 = arith.truncf %18 : vector<16x256xf32> to vector<16x256xbf16>
    %cst = arith.constant dense<0.000000e+00> : vector<16x256xf32>
    %20 = tpu.matmul %9, %19, %cst {dimension_numbers = #tpu.dot_dimension_numbers<[1], [0], [0], [1], [0, 0, 1, 1], [], []>} : vector<16x16xbf16>, vector<16x256xbf16>, vector<16x256xf32> -> vector<16x256xf32>
    %21 = vector.broadcast %12 : vector<16x1xf32> to vector<16x256xf32>
    %22 = arith.addf %20, %21 : vector<16x256xf32>
    %cst_18 = arith.constant 0.000000e+00 : f32
    %23 = vector.broadcast %cst_18 : f32 to vector<16x256xf32>
    %24 = arith.maximumf %22, %23 : vector<16x256xf32>
    %c1_i32 = arith.constant 1 : i32
    %25 = tpu.dynamic_rotate %24 by %c1_i32 dim 1 : vector<16x256xf32>, i32 -> vector<16x256xf32>
    %26 = vector.broadcast %4 : vector<1x256xf32> to vector<16x256xf32>
    %27 = arith.mulf %25, %26 : vector<16x256xf32>
    %c255_i32_19 = arith.constant 255 : i32
    %28 = tpu.dynamic_rotate %24 by %c255_i32_19 dim 1 : vector<16x256xf32>, i32 -> vector<16x256xf32>
    %29 = vector.broadcast %8 : vector<1x256xf32> to vector<16x256xf32>
    %30 = arith.mulf %28, %29 : vector<16x256xf32>
    %31 = vector.extract_strided_slice %10 {offsets = [0, 0], sizes = [16, 1], strides = [1, 1]} : vector<16x3xf32> to vector<16x1xf32>
    %32 = vector.broadcast %31 : vector<16x1xf32> to vector<16x256xf32>
    %33 = arith.mulf %32, %27 : vector<16x256xf32>
    %34 = vector.extract_strided_slice %10 {offsets = [0, 1], sizes = [16, 1], strides = [1, 1]} : vector<16x3xf32> to vector<16x1xf32>
    %35 = vector.broadcast %34 : vector<16x1xf32> to vector<16x256xf32>
    %36 = arith.mulf %35, %24 : vector<16x256xf32>
    %37 = arith.addf %33, %36 : vector<16x256xf32>
    %38 = vector.extract_strided_slice %10 {offsets = [0, 2], sizes = [16, 1], strides = [1, 1]} : vector<16x3xf32> to vector<16x1xf32>
    %39 = vector.broadcast %38 : vector<16x1xf32> to vector<16x256xf32>
    %40 = arith.mulf %39, %30 : vector<16x256xf32>
    %41 = arith.addf %37, %40 : vector<16x256xf32>
    %42 = vector.broadcast %13 : vector<16x1xf32> to vector<16x256xf32>
    %43 = arith.addf %41, %42 : vector<16x256xf32>
    %cst_20 = arith.constant 0.000000e+00 : f32
    %44 = vector.broadcast %cst_20 : f32 to vector<16x256xf32>
    %45 = arith.maximumf %43, %44 : vector<16x256xf32>
    %46 = arith.truncf %45 : vector<16x256xf32> to vector<16x256xbf16>
    %cst_21 = arith.constant dense<0.000000e+00> : vector<16x256xf32>
    %47 = tpu.matmul %11, %46, %cst_21 {dimension_numbers = #tpu.dot_dimension_numbers<[1], [0], [0], [1], [0, 0, 1, 1], [], []>} : vector<16x16xbf16>, vector<16x256xbf16>, vector<16x256xf32> -> vector<16x256xf32>
    %48 = vector.broadcast %14 : vector<16x1xf32> to vector<16x256xf32>
    %49 = arith.addf %47, %48 : vector<16x256xf32>
    %cst_22 = arith.constant 0.000000e+00 : f32
    %50 = vector.broadcast %cst_22 : f32 to vector<16x256xf32>
    %51 = arith.maximumf %49, %50 : vector<16x256xf32>
    %cst_23 = arith.constant dense<0.000000e+00> : vector<16xf32>
    %52 = vector.multi_reduction <add>, %51, %cst_23 [1] : vector<16x256xf32> to vector<16xf32>
    %53 = vector.shape_cast %52 : vector<16xf32> to vector<16x1xf32>
    %cst_24 = arith.constant 2.560000e+02 : f32
    %54 = vector.broadcast %cst_24 : f32 to vector<16x1xf32>
    %55 = arith.divf %53, %54 : vector<16x1xf32>
    %cst_25 = arith.constant dense<0.000000e+00> : vector<2x1xf32>
    %56 = tpu.matmul %15, %55, %cst_25 {dimension_numbers = #tpu.dot_dimension_numbers<[1], [0], [0], [1], [0, 0, 1, 1], [], []>, precision = #tpu.contract_precision<fp32>} : vector<2x16xf32>, vector<16x1xf32>, vector<2x1xf32> -> vector<2x1xf32>
    %cst_26 = arith.constant 0.000000e+00 : f32
    %57 = vector.broadcast %cst_26 : f32 to vector<2x1xf32>
    %58 = arith.maximumf %56, %57 : vector<2x1xf32>
    %cst_27 = arith.constant dense<0.000000e+00> : vector<16x1xf32>
    %59 = tpu.matmul %16, %58, %cst_27 {dimension_numbers = #tpu.dot_dimension_numbers<[1], [0], [0], [1], [0, 0, 1, 1], [], []>, precision = #tpu.contract_precision<fp32>} : vector<16x2xf32>, vector<2x1xf32>, vector<16x1xf32> -> vector<16x1xf32>
    %60 = arith.negf %59 : vector<16x1xf32>
    %61 = math.exp %60 : vector<16x1xf32>
    %cst_28 = arith.constant 1.000000e+00 : f32
    %62 = vector.broadcast %cst_28 : f32 to vector<16x1xf32>
    %63 = arith.addf %62, %61 : vector<16x1xf32>
    %64 = arith.divf %62, %63 : vector<16x1xf32>
    %65 = vector.broadcast %64 : vector<16x1xf32> to vector<16x256xf32>
    %66 = arith.mulf %51, %65 : vector<16x256xf32>
    %c0_29 = arith.constant 0 : index
    %c0_30 = arith.constant 0 : index
    %c0_31 = arith.constant 0 : index
    %67 = vector.load %arg1[%c0_29, %c0_30, %c0_31] : memref<2x16x256xf32, #tpu.memory_space<vmem>>, vector<1x16x256xf32>
    %68 = vector.shape_cast %67 : vector<1x16x256xf32> to vector<16x256xf32>
    %69 = arith.addf %66, %68 : vector<16x256xf32>
    %c0_32 = arith.constant 0 : index
    %c0_33 = arith.constant 0 : index
    %c0_34 = arith.constant 0 : index
    %70 = vector.load %arg10[%c0_32, %c0_33, %c0_34] : memref<2x16x256xf32, #tpu.memory_space<vmem>>, vector<1x16x256xf32>
    %71 = vector.shape_cast %70 : vector<1x16x256xf32> to vector<16x256xf32>
    %72 = vector.shape_cast %69 : vector<16x256xf32> to vector<1x16x256xf32>
    tpu.vector_store %arg10[%c0_32, %c0_33, %c0_34], %72 {strides = array<i32>} : memref<2x16x256xf32, #tpu.memory_space<vmem>>, vector<1x16x256xf32>,
    %c1 = arith.constant 1 : index
    %c0_35 = arith.constant 0 : index
    %c0_36 = arith.constant 0 : index
    %73 = vector.load %arg1[%c1, %c0_35, %c0_36] : memref<2x16x256xf32, #tpu.memory_space<vmem>>, vector<1x16x256xf32>
    %74 = vector.shape_cast %73 : vector<1x16x256xf32> to vector<16x256xf32>
    %75 = arith.truncf %74 : vector<16x256xf32> to vector<16x256xbf16>
    %cst_37 = arith.constant dense<0.000000e+00> : vector<16x256xf32>
    %76 = tpu.matmul %9, %75, %cst_37 {dimension_numbers = #tpu.dot_dimension_numbers<[1], [0], [0], [1], [0, 0, 1, 1], [], []>} : vector<16x16xbf16>, vector<16x256xbf16>, vector<16x256xf32> -> vector<16x256xf32>
    %77 = vector.broadcast %12 : vector<16x1xf32> to vector<16x256xf32>
    %78 = arith.addf %76, %77 : vector<16x256xf32>
    %cst_38 = arith.constant 0.000000e+00 : f32
    %79 = vector.broadcast %cst_38 : f32 to vector<16x256xf32>
    %80 = arith.maximumf %78, %79 : vector<16x256xf32>
    %c1_i32_39 = arith.constant 1 : i32
    %81 = tpu.dynamic_rotate %80 by %c1_i32_39 dim 1 : vector<16x256xf32>, i32 -> vector<16x256xf32>
    %82 = vector.broadcast %4 : vector<1x256xf32> to vector<16x256xf32>
    %83 = arith.mulf %81, %82 : vector<16x256xf32>
    %c255_i32_40 = arith.constant 255 : i32
    %84 = tpu.dynamic_rotate %80 by %c255_i32_40 dim 1 : vector<16x256xf32>, i32 -> vector<16x256xf32>
    %85 = vector.broadcast %8 : vector<1x256xf32> to vector<16x256xf32>
    %86 = arith.mulf %84, %85 : vector<16x256xf32>
    %87 = vector.extract_strided_slice %10 {offsets = [0, 0], sizes = [16, 1], strides = [1, 1]} : vector<16x3xf32> to vector<16x1xf32>
    %88 = vector.broadcast %87 : vector<16x1xf32> to vector<16x256xf32>
    %89 = arith.mulf %88, %83 : vector<16x256xf32>
    %90 = vector.extract_strided_slice %10 {offsets = [0, 1], sizes = [16, 1], strides = [1, 1]} : vector<16x3xf32> to vector<16x1xf32>
    %91 = vector.broadcast %90 : vector<16x1xf32> to vector<16x256xf32>
    %92 = arith.mulf %91, %80 : vector<16x256xf32>
    %93 = arith.addf %89, %92 : vector<16x256xf32>
    %94 = vector.extract_strided_slice %10 {offsets = [0, 2], sizes = [16, 1], strides = [1, 1]} : vector<16x3xf32> to vector<16x1xf32>
    %95 = vector.broadcast %94 : vector<16x1xf32> to vector<16x256xf32>
    %96 = arith.mulf %95, %86 : vector<16x256xf32>
    %97 = arith.addf %93, %96 : vector<16x256xf32>
    %98 = vector.broadcast %13 : vector<16x1xf32> to vector<16x256xf32>
    %99 = arith.addf %97, %98 : vector<16x256xf32>
    %cst_41 = arith.constant 0.000000e+00 : f32
    %100 = vector.broadcast %cst_41 : f32 to vector<16x256xf32>
    %101 = arith.maximumf %99, %100 : vector<16x256xf32>
    %102 = arith.truncf %101 : vector<16x256xf32> to vector<16x256xbf16>
    %cst_42 = arith.constant dense<0.000000e+00> : vector<16x256xf32>
    %103 = tpu.matmul %11, %102, %cst_42 {dimension_numbers = #tpu.dot_dimension_numbers<[1], [0], [0], [1], [0, 0, 1, 1], [], []>} : vector<16x16xbf16>, vector<16x256xbf16>, vector<16x256xf32> -> vector<16x256xf32>
    %104 = vector.broadcast %14 : vector<16x1xf32> to vector<16x256xf32>
    %105 = arith.addf %103, %104 : vector<16x256xf32>
    %cst_43 = arith.constant 0.000000e+00 : f32
    %106 = vector.broadcast %cst_43 : f32 to vector<16x256xf32>
    %107 = arith.maximumf %105, %106 : vector<16x256xf32>
    %cst_44 = arith.constant dense<0.000000e+00> : vector<16xf32>
    %108 = vector.multi_reduction <add>, %107, %cst_44 [1] : vector<16x256xf32> to vector<16xf32>
    %109 = vector.shape_cast %108 : vector<16xf32> to vector<16x1xf32>
    %cst_45 = arith.constant 2.560000e+02 : f32
    %110 = vector.broadcast %cst_45 : f32 to vector<16x1xf32>
    %111 = arith.divf %109, %110 : vector<16x1xf32>
    %cst_46 = arith.constant dense<0.000000e+00> : vector<2x1xf32>
    %112 = tpu.matmul %15, %111, %cst_46 {dimension_numbers = #tpu.dot_dimension_numbers<[1], [0], [0], [1], [0, 0, 1, 1], [], []>, precision = #tpu.contract_precision<fp32>} : vector<2x16xf32>, vector<16x1xf32>, vector<2x1xf32> -> vector<2x1xf32>
    %cst_47 = arith.constant 0.000000e+00 : f32
    %113 = vector.broadcast %cst_47 : f32 to vector<2x1xf32>
    %114 = arith.maximumf %112, %113 : vector<2x1xf32>
    %cst_48 = arith.constant dense<0.000000e+00> : vector<16x1xf32>
    %115 = tpu.matmul %16, %114, %cst_48 {dimension_numbers = #tpu.dot_dimension_numbers<[1], [0], [0], [1], [0, 0, 1, 1], [], []>, precision = #tpu.contract_precision<fp32>} : vector<16x2xf32>, vector<2x1xf32>, vector<16x1xf32> -> vector<16x1xf32>
    %116 = arith.negf %115 : vector<16x1xf32>
    %117 = math.exp %116 : vector<16x1xf32>
    %cst_49 = arith.constant 1.000000e+00 : f32
    %118 = vector.broadcast %cst_49 : f32 to vector<16x1xf32>
    %119 = arith.addf %118, %117 : vector<16x1xf32>
    %120 = arith.divf %118, %119 : vector<16x1xf32>
    %121 = vector.broadcast %120 : vector<16x1xf32> to vector<16x256xf32>
    %122 = arith.mulf %107, %121 : vector<16x256xf32>
    %c1_50 = arith.constant 1 : index
    %c0_51 = arith.constant 0 : index
    %c0_52 = arith.constant 0 : index
    %123 = vector.load %arg1[%c1_50, %c0_51, %c0_52] : memref<2x16x256xf32, #tpu.memory_space<vmem>>, vector<1x16x256xf32>
    %124 = vector.shape_cast %123 : vector<1x16x256xf32> to vector<16x256xf32>
    %125 = arith.addf %122, %124 : vector<16x256xf32>
    %c1_53 = arith.constant 1 : index
    %c0_54 = arith.constant 0 : index
    %c0_55 = arith.constant 0 : index
    %126 = vector.load %arg10[%c1_53, %c0_54, %c0_55] : memref<2x16x256xf32, #tpu.memory_space<vmem>>, vector<1x16x256xf32>
    %127 = vector.shape_cast %126 : vector<1x16x256xf32> to vector<16x256xf32>
    %128 = vector.shape_cast %125 : vector<16x256xf32> to vector<1x16x256xf32>
    tpu.vector_store %arg10[%c1_53, %c0_54, %c0_55], %128 {strides = array<i32>} : memref<2x16x256xf32, #tpu.memory_space<vmem>>, vector<1x16x256xf32>,
    return
  }
  func.func @transform_0(%arg0: i32) -> (i32, i32, i32) {
    %c0_i32 = arith.constant 0 : i32
    %c0_i32_0 = arith.constant 0 : i32
    %c0_i32_1 = arith.constant 0 : i32
    return %arg0, %c0_i32, %c0_i32_0 : i32, i32, i32
  }
  func.func @transform_1(%arg0: i32) -> (i32, i32) {
    %c0_i32 = arith.constant 0 : i32
    %c0_i32_0 = arith.constant 0 : i32
    %c0_i32_1 = arith.constant 0 : i32
    return %c0_i32, %c0_i32_0 : i32, i32
  }
  func.func @transform_2(%arg0: i32) -> (i32, i32) {
    %c0_i32 = arith.constant 0 : i32
    %c0_i32_0 = arith.constant 0 : i32
    %c0_i32_1 = arith.constant 0 : i32
    return %c0_i32, %c0_i32_0 : i32, i32
  }
  func.func @transform_3(%arg0: i32) -> (i32, i32) {
    %c0_i32 = arith.constant 0 : i32
    %c0_i32_0 = arith.constant 0 : i32
    %c0_i32_1 = arith.constant 0 : i32
    return %c0_i32, %c0_i32_0 : i32, i32
  }
  func.func @transform_4(%arg0: i32) -> (i32, i32) {
    %c0_i32 = arith.constant 0 : i32
    %c0_i32_0 = arith.constant 0 : i32
    %c0_i32_1 = arith.constant 0 : i32
    return %c0_i32, %c0_i32_0 : i32, i32
  }
  func.func @transform_5(%arg0: i32) -> (i32, i32) {
    %c0_i32 = arith.constant 0 : i32
    %c0_i32_0 = arith.constant 0 : i32
    %c0_i32_1 = arith.constant 0 : i32
    return %c0_i32, %c0_i32_0 : i32, i32
  }
  func.func @transform_6(%arg0: i32) -> (i32, i32) {
    %c0_i32 = arith.constant 0 : i32
    %c0_i32_0 = arith.constant 0 : i32
    %c0_i32_1 = arith.constant 0 : i32
    return %c0_i32, %c0_i32_0 : i32, i32
  }
  func.func @transform_7(%arg0: i32) -> (i32, i32) {
    %c0_i32 = arith.constant 0 : i32
    %c0_i32_0 = arith.constant 0 : i32
    %c0_i32_1 = arith.constant 0 : i32
    return %c0_i32, %c0_i32_0 : i32, i32
  }
  func.func @transform_8(%arg0: i32) -> (i32, i32) {
    %c0_i32 = arith.constant 0 : i32
    %c0_i32_0 = arith.constant 0 : i32
    %c0_i32_1 = arith.constant 0 : i32
    return %c0_i32, %c0_i32_0 : i32, i32
  }
  func.func @transform_9(%arg0: i32) -> (i32, i32, i32) {
    %c0_i32 = arith.constant 0 : i32
    %c0_i32_0 = arith.constant 0 : i32
    %c0_i32_1 = arith.constant 0 : i32
    return %arg0, %c0_i32, %c0_i32_0 : i32, i32, i32
  }
}

</mosaic_0001>

<llo_original>
// kernel: tpu_custom_call.1
$region0: #{tpu_custom_call.1}
  #allocation0 [shape = 'u32[]', space=smem, size = 0x4, offset = 0x4, fixed_abs, tag = 'smem constant byte address 0x4 - core index']
  #allocation1 [shape = 'u32[144,128]{1,0:T(1,128)}', space=vmem, size = 0x12000, scoped, tag = 'internal scratch']
  %s0 = inlined_call_operand.hbm [shape: f32[8,16,256], index: 0, kind: input, shape index: {}]
  %s1 = inlined_call_operand.vmem [shape: bf16[16,16], index: 1, kind: input, shape index: {}]
  %s2 = inlined_call_operand.vmem [shape: f32[16,1], index: 2, kind: input, shape index: {}]
  %s3 = inlined_call_operand.vmem [shape: f32[16,3], index: 3, kind: input, shape index: {}]
  %s4 = inlined_call_operand.vmem [shape: f32[16,1], index: 4, kind: input, shape index: {}]
  %s5 = inlined_call_operand.vmem [shape: bf16[16,16], index: 5, kind: input, shape index: {}]
  %s6 = inlined_call_operand.vmem [shape: f32[16,1], index: 6, kind: input, shape index: {}]
  %s7 = inlined_call_operand.vmem [shape: f32[2,16], index: 7, kind: input, shape index: {}]
  %s8 = inlined_call_operand.vmem [shape: f32[16,2], index: 8, kind: input, shape index: {}]
  %s9 = inlined_call_operand.hbm [shape: f32[8,16,256], index: 9, kind: output, shape index: {}]
  %s10 = sld [smem:[#allocation0]]
  $region73: #{tpu_custom_call.1} parent=0
    _
  %s12 = ssub.s32 1, %s10
  %s13 = scalar_select 0, %s12, %s10
  $region1: #{tpu_custom_call.1} parent=0
    #allocation2 [shape = 'u8[65536]{0}', space=vmem, size = 0x10000, scoped, tag = 'input window, operand 0']
    #allocation3 [shape = 's32[2]{0}', space=sflag, size = 0x8, scoped, tag = 'scoped memory for tpu_custom_call.1']
    #allocation4 [shape = 's32[2]{0}', space=sflag, size = 0x8, scoped, tag = 'scoped memory for tpu_custom_call.1']
    #allocation5 [shape = 'u8[65536]{0}', space=vmem, size = 0x10000, scoped, tag = 'output window, operand 0']
    %14 = vsyncpa [#allocation3], 0
    %s15 = scalar_lea.sflag [#allocation3], 1
    %16 = vsyncpa %s15, 0
    %17 = vsyncpa [#allocation4], 0
    %s18 = scalar_lea.sflag [#allocation4], 1
    %19 = vsyncpa %s18, 0
    loop: start=0, step=1, limit=6
    $region2: #{tpu_custom_call.1} parent=1 // loop_pre_header
      _
    $region3: #{tpu_custom_call.1} parent=1 // loop_header
      %s21 = sphi 0, %s25
      %p22 = scmp.ge.s32.totalorder %s21, 6
      %s31 = sphi 0, %s33
      %s34 = sphi 0, %s31
      %s35 = sphi 0, %s34
      %s51 = sphi 0, %s35
      %s55 = sphi 0, %s55
      %s57 = sphi 0, %s55
      %s58 = sphi 0, %s57
      %s72 = sphi 0, %s58
      %s76 = sphi 0, %s76
      %s78 = sphi 0, %s76
      %s79 = sphi 0, %s78
      %s93 = sphi 0, %s79
      %s97 = sphi 0, %s97
      %s99 = sphi 0, %s97
      %s100 = sphi 0, %s99
      %s114 = sphi 0, %s100
      %s118 = sphi 0, %s118
      %s120 = sphi 0, %s118
      %s121 = sphi 0, %s120
      %s135 = sphi 0, %s121
      %s139 = sphi 0, %s139
      %s141 = sphi 0, %s139
      %s142 = sphi 0, %s141
      %s156 = sphi 0, %s142
      %s160 = sphi 0, %s160
      %s162 = sphi 0, %s160
      %s163 = sphi 0, %s162
      %s177 = sphi 0, %s163
      %s181 = sphi 0, %s181
      %s183 = sphi 0, %s181
      %s184 = sphi 0, %s183
      %s198 = sphi 0, %s184
      %s202 = sphi 0, %s202
      %s204 = sphi 0, %s202
      %s205 = sphi 0, %s204
      %s219 = sphi 0, %s205
      %s225 = sphi 0, %s227
      %s228 = sphi 0, %s225
      %s229 = sphi 0, %s228
      %s245 = sphi 0, %s229
    $region4: #{tpu_custom_call.1} parent=1 // loop_header_branch
      %24 = sbr.rel (%p22) target = $region8
    $region5: #{tpu_custom_call.1} parent=1 // loop_body
      %s26 = ssub.s32 %s21, 1
      %s27 = ssub.s32 %s21, 2
      %s28 = sadd.s32 %s21, 1
      %s29 = ssub.s32 %s21, %s28
      %p30 = scmp.eq.s32.totalorder %s29, 0
      %s32 = sadd.s32 %s31, 1
      %s33 = scalar_select %p30, %s31, %s32
      %p36 = pneg %p30
      %p37 = scmp.eq.s32.totalorder %s21, 3
      %p38 = por %p36, %p37
      %p39 = scmp.ne.s32.totalorder %s31, %s34
      %p40 = scmp.eq.s32.totalorder %s21, 0
      %p41 = por %p39, %p40
      %p42 = scmp.ne.s32.totalorder %s31, %s34
      %p43 = scmp.eq.s32.totalorder %s26, 3
      %p44 = por %p42, %p43
      %p45 = scmp.ne.s32.totalorder %s34, %s35
      %p46 = scmp.eq.s32.totalorder %s26, 0
      %p47 = por %p45, %p46
      %p48 = scmp.ne.s32.totalorder %s34, %s35
      %p49 = scmp.eq.s32.totalorder %s27, 3
      %p50 = por %p48, %p49
      %p52 = scmp.ne.s32.totalorder %s35, %s51
      %p53 = scmp.eq.s32.totalorder %s27, 0
      %p54 = por %p52, %p53
      %s56 = sadd.s32 %s55, 1
      %p59 = scmp.eq.s32.totalorder %s21, 3
      %p60 = scmp.ne.s32.totalorder %s55, %s57
      %p61 = scmp.eq.s32.totalorder %s21, 0
      %p62 = por %p60, %p61
      %p63 = scmp.ne.s32.totalorder %s55, %s57
      %p64 = scmp.eq.s32.totalorder %s26, 3
      %p65 = por %p63, %p64
      %p66 = scmp.ne.s32.totalorder %s57, %s58
      %p67 = scmp.eq.s32.totalorder %s26, 0
      %p68 = por %p66, %p67
      %p69 = scmp.ne.s32.totalorder %s57, %s58
      %p70 = scmp.eq.s32.totalorder %s27, 3
      %p71 = por %p69, %p70
      %p73 = scmp.ne.s32.totalorder %s58, %s72
      %p74 = scmp.eq.s32.totalorder %s27, 0
      %p75 = por %p73, %p74
      %s77 = sadd.s32 %s76, 1
      %p80 = scmp.eq.s32.totalorder %s21, 3
      %p81 = scmp.ne.s32.totalorder %s76, %s78
      %p82 = scmp.eq.s32.totalorder %s21, 0
      %p83 = por %p81, %p82
      %p84 = scmp.ne.s32.totalorder %s76, %s78
      %p85 = scmp.eq.s32.totalorder %s26, 3
      %p86 = por %p84, %p85
      %p87 = scmp.ne.s32.totalorder %s78, %s79
      %p88 = scmp.eq.s32.totalorder %s26, 0
      %p89 = por %p87, %p88
      %p90 = scmp.ne.s32.totalorder %s78, %s79
      %p91 = scmp.eq.s32.totalorder %s27, 3
      %p92 = por %p90, %p91
      %p94 = scmp.ne.s32.totalorder %s79, %s93
      %p95 = scmp.eq.s32.totalorder %s27, 0
      %p96 = por %p94, %p95
      %s98 = sadd.s32 %s97, 1
      %p101 = scmp.eq.s32.totalorder %s21, 3
      %p102 = scmp.ne.s32.totalorder %s97, %s99
      %p103 = scmp.eq.s32.totalorder %s21, 0
      %p104 = por %p102, %p103
      %p105 = scmp.ne.s32.totalorder %s97, %s99
      %p106 = scmp.eq.s32.totalorder %s26, 3
      %p107 = por %p105, %p106
      %p108 = scmp.ne.s32.totalorder %s99, %s100
      %p109 = scmp.eq.s32.totalorder %s26, 0
      %p110 = por %p108, %p109
      %p111 = scmp.ne.s32.totalorder %s99, %s100
      %p112 = scmp.eq.s32.totalorder %s27, 3
      %p113 = por %p111, %p112
      %p115 = scmp.ne.s32.totalorder %s100, %s114
      %p116 = scmp.eq.s32.totalorder %s27, 0
      %p117 = por %p115, %p116
      %s119 = sadd.s32 %s118, 1
      %p122 = scmp.eq.s32.totalorder %s21, 3
      %p123 = scmp.ne.s32.totalorder %s118, %s120
      %p124 = scmp.eq.s32.totalorder %s21, 0
      %p125 = por %p123, %p124
      %p126 = scmp.ne.s32.totalorder %s118, %s120
      %p127 = scmp.eq.s32.totalorder %s26, 3
      %p128 = por %p126, %p127
      %p129 = scmp.ne.s32.totalorder %s120, %s121
      %p130 = scmp.eq.s32.totalorder %s26, 0
      %p131 = por %p129, %p130
      %p132 = scmp.ne.s32.totalorder %s120, %s121
      %p133 = scmp.eq.s32.totalorder %s27, 3
      %p134 = por %p132, %p133
      %p136 = scmp.ne.s32.totalorder %s121, %s135
      %p137 = scmp.eq.s32.totalorder %s27, 0
      %p138 = por %p136, %p137
      %s140 = sadd.s32 %s139, 1
      %p143 = scmp.eq.s32.totalorder %s21, 3
      %p144 = scmp.ne.s32.totalorder %s139, %s141
      %p145 = scmp.eq.s32.totalorder %s21, 0
      %p146 = por %p144, %p145
      %p147 = scmp.ne.s32.totalorder %s139, %s141
      %p148 = scmp.eq.s32.totalorder %s26, 3
      %p149 = por %p147, %p148
      %p150 = scmp.ne.s32.totalorder %s141, %s142
      %p151 = scmp.eq.s32.totalorder %s26, 0
      %p152 = por %p150, %p151
      %p153 = scmp.ne.s32.totalorder %s141, %s142
      %p154 = scmp.eq.s32.totalorder %s27, 3
      %p155 = por %p153, %p154
      %p157 = scmp.ne.s32.totalorder %s142, %s156
      %p158 = scmp.eq.s32.totalorder %s27, 0
      %p159 = por %p157, %p158
      %s161 = sadd.s32 %s160, 1
      %p164 = scmp.eq.s32.totalorder %s21, 3
      %p165 = scmp.ne.s32.totalorder %s160, %s162
      %p166 = scmp.eq.s32.totalorder %s21, 0
      %p167 = por %p165, %p166
      %p168 = scmp.ne.s32.totalorder %s160, %s162
      %p169 = scmp.eq.s32.totalorder %s26, 3
      %p170 = por %p168, %p169
      %p171 = scmp.ne.s32.totalorder %s162, %s163
      %p172 = scmp.eq.s32.totalorder %s26, 0
      %p173 = por %p171, %p172
      %p174 = scmp.ne.s32.totalorder %s162, %s163
      %p175 = scmp.eq.s32.totalorder %s27, 3
      %p176 = por %p174, %p175
      %p178 = scmp.ne.s32.totalorder %s163, %s177
      %p179 = scmp.eq.s32.totalorder %s27, 0
      %p180 = por %p178, %p179
      %s182 = sadd.s32 %s181, 1
      %p185 = scmp.eq.s32.totalorder %s21, 3
      %p186 = scmp.ne.s32.totalorder %s181, %s183
      %p187 = scmp.eq.s32.totalorder %s21, 0
      %p188 = por %p186, %p187
      %p189 = scmp.ne.s32.totalorder %s181, %s183
      %p190 = scmp.eq.s32.totalorder %s26, 3
      %p191 = por %p189, %p190
      %p192 = scmp.ne.s32.totalorder %s183, %s184
      %p193 = scmp.eq.s32.totalorder %s26, 0
      %p194 = por %p192, %p193
      %p195 = scmp.ne.s32.totalorder %s183, %s184
      %p196 = scmp.eq.s32.totalorder %s27, 3
      %p197 = por %p195, %p196
      %p199 = scmp.ne.s32.totalorder %s184, %s198
      %p200 = scmp.eq.s32.totalorder %s27, 0
      %p201 = por %p199, %p200
      %s203 = sadd.s32 %s202, 1
      %p206 = scmp.eq.s32.totalorder %s21, 3
      %p207 = scmp.ne.s32.totalorder %s202, %s204
      %p208 = scmp.eq.s32.totalorder %s21, 0
      %p209 = por %p207, %p208
      %p210 = scmp.ne.s32.totalorder %s202, %s204
      %p211 = scmp.eq.s32.totalorder %s26, 3
      %p212 = por %p210, %p211
      %p213 = scmp.ne.s32.totalorder %s204, %s205
      %p214 = scmp.eq.s32.totalorder %s26, 0
      %p215 = por %p213, %p214
      %p216 = scmp.ne.s32.totalorder %s204, %s205
      %p217 = scmp.eq.s32.totalorder %s27, 3
      %p218 = por %p216, %p217
      %p220 = scmp.ne.s32.totalorder %s205, %s219
      %p221 = scmp.eq.s32.totalorder %s27, 0
      %p222 = por %p220, %p221
      %s223 = ssub.s32 %s21, %s28
      %p224 = scmp.eq.s32.totalorder %s223, 0
      %s226 = sadd.s32 %s225, 1
      %s227 = scalar_select %p224, %s225, %s226
      %p230 = pneg %p224
      %p231 = scmp.eq.s32.totalorder %s21, 3
      %p232 = por %p230, %p231
      %p233 = scmp.ne.s32.totalorder %s225, %s228
      %p234 = scmp.eq.s32.totalorder %s21, 0
      %p235 = por %p233, %p234
      %p236 = scmp.ne.s32.totalorder %s225, %s228
      %p237 = scmp.eq.s32.totalorder %s26, 3
      %p238 = por %p236, %p237
      %p239 = scmp.ne.s32.totalorder %s228, %s229
      %p240 = scmp.eq.s32.totalorder %s26, 0
      %p241 = por %p239, %p240
      %p242 = scmp.ne.s32.totalorder %s228, %s229
      %p243 = scmp.eq.s32.totalorder %s27, 3
      %p244 = por %p242, %p243
      %p246 = scmp.ne.s32.totalorder %s229, %s245
      %p247 = scmp.eq.s32.totalorder %s27, 0
      %p248 = por %p246, %p247
      %p249 = scmp.le.s32.totalorder 1, %s21
      %p250 = scmp.lt.s32.totalorder %s21, 5
      %p251 = pnand %p249, %p250
      %p252 = pneg %p251
      // Predicated region
      $region9: #{tpu_custom_call.1} parent=5 // pred_check
        _
      $region10: #{tpu_custom_call.1} parent=5 // pred_check_branch
        %254 = sbr.rel (%p251) target = $region12
      $region11: #{tpu_custom_call.1} parent=5 // pred_region
        %s255 = ssub.s32 %s21, 1
        // Predicated region
        $region13: #{tpu_custom_call.1} parent=11 // pred_check
          %p256 = pneg %p68
        $region14: #{tpu_custom_call.1} parent=11 // pred_check_branch
          %258 = sbr.rel (%p256) target = $region16
        $region15: #{tpu_custom_call.1} parent=11 // pred_region
          _
        $region16: #{tpu_custom_call.1} parent=11 // pred_fallthru
          _
        // Predicated region
        $region17: #{tpu_custom_call.1} parent=11 // pred_check
          %p259 = pneg %p89
        $region18: #{tpu_custom_call.1} parent=11 // pred_check_branch
          %261 = sbr.rel (%p259) target = $region20
        $region19: #{tpu_custom_call.1} parent=11 // pred_region
          _
        $region20: #{tpu_custom_call.1} parent=11 // pred_fallthru
          _
        // Predicated region
        $region21: #{tpu_custom_call.1} parent=11 // pred_check
          %p262 = pneg %p110
        $region22: #{tpu_custom_call.1} parent=11 // pred_check_branch
          %264 = sbr.rel (%p262) target = $region24
        $region23: #{tpu_custom_call.1} parent=11 // pred_region
          _
        $region24: #{tpu_custom_call.1} parent=11 // pred_fallthru
          _
        // Predicated region
        $region25: #{tpu_custom_call.1} parent=11 // pred_check
          %p265 = pneg %p131
        $region26: #{tpu_custom_call.1} parent=11 // pred_check_branch
          %267 = sbr.rel (%p265) target = $region28
        $region27: #{tpu_custom_call.1} parent=11 // pred_region
          _
        $region28: #{tpu_custom_call.1} parent=11 // pred_fallthru
          _
        // Predicated region
        $region29: #{tpu_custom_call.1} parent=11 // pred_check
          %p268 = pneg %p152
        $region30: #{tpu_custom_call.1} parent=11 // pred_check_branch
          %270 = sbr.rel (%p268) target = $region32
        $region31: #{tpu_custom_call.1} parent=11 // pred_region
          _
        $region32: #{tpu_custom_call.1} parent=11 // pred_fallthru
          _
        // Predicated region
        $region33: #{tpu_custom_call.1} parent=11 // pred_check
          %p271 = pneg %p173
        $region34: #{tpu_custom_call.1} parent=11 // pred_check_branch
          %273 = sbr.rel (%p271) target = $region36
        $region35: #{tpu_custom_call.1} parent=11 // pred_region
          _
        $region36: #{tpu_custom_call.1} parent=11 // pred_fallthru
          _
        // Predicated region
        $region37: #{tpu_custom_call.1} parent=11 // pred_check
          %p274 = pneg %p194
        $region38: #{tpu_custom_call.1} parent=11 // pred_check_branch
          %276 = sbr.rel (%p274) target = $region40
        $region39: #{tpu_custom_call.1} parent=11 // pred_region
          _
        $region40: #{tpu_custom_call.1} parent=11 // pred_fallthru
          _
        // Predicated region
        $region41: #{tpu_custom_call.1} parent=11 // pred_check
          %p277 = pneg %p215
        $region42: #{tpu_custom_call.1} parent=11 // pred_check_branch
          %279 = sbr.rel (%p277) target = $region44
        $region43: #{tpu_custom_call.1} parent=11 // pred_region
          _
        $region44: #{tpu_custom_call.1} parent=11 // pred_fallthru
          _
      $region12: #{tpu_custom_call.1} parent=5 // pred_fallthru
        _
      %p280 = scmp.lt.s32.totalorder %s21, 4
      // Predicated region
      $region45: #{tpu_custom_call.1} parent=5 // pred_check
        %p281 = pneg %p280
      $region46: #{tpu_custom_call.1} parent=5 // pred_check_branch
        %283 = sbr.rel (%p281) target = $region48
      $region47: #{tpu_custom_call.1} parent=5 // pred_region
        // Predicated region
        $region49: #{tpu_custom_call.1} parent=47 // pred_check
          %p284 = pneg %p41
        $region50: #{tpu_custom_call.1} parent=47 // pred_check_branch
          %286 = sbr.rel (%p284) target = $region52
        $region51: #{tpu_custom_call.1} parent=47 // pred_region
          %s287 = sand.u32 %s31, 1
          %s288 = scalar_lea.sflag [#allocation3], %s287
          %s289 = sand.u32 %s31, 1
          %s290 = smul.addr %s289, 64
          %s291 = scalar_lea.vmem [#allocation2], %s290
          %s292 = smul.u32 2, %s21
          %s294 = ssub.s32 1024, 1024
          %295 = vsyncadd %s288, %s294
          %s296 = smul.addr %s292, 4
          %s297 = smul.addr %s296, 128
          %s298 = scalar_lea.hbm %s0, %s297
          %s299 = sshll.u32 %s291, 4
          %s300 = int_to_ptr.vmem [resolvable:$true] %s299
          %305 = dma.hbm_to_vmem [thread:$0]  %s298, 1024, %s300, %s288, 256, 256, 16
        $region52: #{tpu_custom_call.1} parent=47 // pred_fallthru
          _
      $region48: #{tpu_custom_call.1} parent=5 // pred_fallthru
        _
      %p306 = scmp.le.s32.totalorder 1, %s21
      %p307 = scmp.lt.s32.totalorder %s21, 5
      %p308 = pnand %p306, %p307
      %p309 = pneg %p308
      // Predicated region
      $region53: #{tpu_custom_call.1} parent=5 // pred_check
        _
      $region54: #{tpu_custom_call.1} parent=5 // pred_check_branch
        %311 = sbr.rel (%p308) target = $region56
      $region55: #{tpu_custom_call.1} parent=5 // pred_region
        %s312 = ssub.s32 %s21, 1
        %s313 = sand.u32 %s34, 1
        %s314 = scalar_lea.sflag [#allocation3], %s313
        %s315 = sand.u32 %s34, 1
        %s316 = smul.addr %s315, 64
        %s317 = scalar_lea.vmem [#allocation2], %s316
        // Predicated region
        $region57: #{tpu_custom_call.1} parent=55 // pred_check
          %p318 = pneg %p47
        $region58: #{tpu_custom_call.1} parent=55 // pred_check_branch
          %320 = sbr.rel (%p318) target = $region60
        $region59: #{tpu_custom_call.1} parent=55 // pred_region
          %321 = dma.done %s314, 1024
        $region60: #{tpu_custom_call.1} parent=55 // pred_fallthru
          _
        %s322 = sand.u32 %s34, 1
        %s323 = scalar_lea.sflag [#allocation3], %s322
        %s324 = sand.u32 %s34, 1
        %s325 = smul.addr %s324, 64
        %s326 = scalar_lea.vmem [#allocation2], %s325
        %p327 = pneg %p47
        %p328 = pneg %p44
        %p329 = pneg %p68
        %p330 = pneg %p65
        %p331 = pneg %p89
        %p332 = pneg %p86
        %p333 = pneg %p110
        %p334 = pneg %p107
        %p335 = pneg %p131
        %p336 = pneg %p128
        %p337 = pneg %p152
        %p338 = pneg %p149
        %p339 = pneg %p173
        %p340 = pneg %p170
        %p341 = pneg %p194
        %p342 = pneg %p191
        %p343 = pneg %p215
        %p344 = pneg %p212
        %p345 = pneg %p241
        %p346 = pneg %p238
        %s347 = sand.u32 %s228, 1
        %s348 = scalar_lea.sflag [#allocation4], %s347
        %s349 = sand.u32 %s228, 1
        %s350 = smul.addr %s349, 64
        %s351 = scalar_lea.vmem [#allocation5], %s350
        %s352 = smul.u32 2, %s26
        %s353 = smul.u32 2, %s26
        %v355 = vlaneseq
        %v356 = vand.u32 %v355, 127
        %v357 = vadd.s32 %v356, 128
        %vm358 = vcmp.ne.s32.totalorder %v356, 0
        %vm359 = vcmp.ne.s32.totalorder %v357, 0
        %v360 = vsel %vm358, 1, 0
        %v361 = vsel %vm359, 1, 0
        %v362 = vcvt.s32.f32 %v360
        %v363 = vcvt.s32.f32 %v361
        %vm364 = vcmp.ne.s32.totalorder %v356, 255
        %vm365 = vcmp.ne.s32.totalorder %v357, 255
        %v366 = vsel %vm364, 1, 0
        %v367 = vsel %vm365, 1, 0
        %v368 = vcvt.s32.f32 %v366
        %v369 = vcvt.s32.f32 %v367
        %v370 = vld [vmem:[%s1] sm:$0xf]
        %v371 = vld [vmem:[%s1 + $0x4] sm:$0xf]
        %v372 = vld [vmem:[%s3] sm:$0xff]
        %v373 = vld [vmem:[%s3 + $0x8] sm:$0xff]
        %v374 = vld [vmem:[%s5] sm:$0xf]
        %v375 = vld [vmem:[%s5 + $0x4] sm:$0xf]
        %v376 = vld [vmem:[%s2] sm:$0xff]
        %v377 = vld [vmem:[%s2 + $0x8] sm:$0xff]
        %v378 = vld [vmem:[%s4] sm:$0xff]
        %v379 = vld [vmem:[%s4 + $0x8] sm:$0xff]
        %v380 = vld [vmem:[%s6] sm:$0xff]
        %v381 = vld [vmem:[%s6 + $0x8] sm:$0xff]
        %v382 = vld [vmem:[%s7] sm:$0x3]
        %v383 = vld [vmem:[%s8] sm:$0xff]
        %v384 = vld [vmem:[%s8 + $0x8] sm:$0xff]
        %v385 = vld [vmem:[%s317] sm:$0xff]
        %v386 = vld [vmem:[%s317 + $0x8] sm:$0xff]
        %v387 = vld [vmem:[%s317 + $0x10] sm:$0xff]
        %v388 = vld [vmem:[%s317 + $0x18] sm:$0xff]
        %v389 = vpack.c.bf16 %v387, %v385
        %v390 = vpack.c.bf16 %v388, %v386
        %392 = vset.pattern.permute.xlu0 0
        %393 = vperm.xlu0 %392, %v376
        %v394 = vpop.permute.xlu0 %393
        %397 = vset.pattern.permute.xlu0 0
        %398 = vperm.xlu0 %397, %v377
        %v399 = vpop.permute.xlu0 %398
        %v403 = vunpack.c.l.b16 %v370
        %v404 = vunpack.c.l.b16 %v371
        %v405 = vpack.c.b16 %v404, %v403
        %vm406 = vcmask 130048
        %v408 = vsel %vm406, %v405, 0
        %410 = vmatprep.subr.bf16.mxu0 %v390
        %411 = vmatpush1.bf16.msra.mxu0 %v389
        %412 = vmatprep.subr.bf16.mxu0 0
        %413 = vmatpush1.bf16.msra.mxu0 0
        %414 = vmatprep.subr.bf16.mxu0 0
        %415 = vmatpush1.bf16.msra.mxu0 0
        %416 = vmatprep.subr.bf16.mxu0 0
        %417 = vmatpush1.bf16.msra.mxu0 0
        %418 = vmatprep.subr.bf16.mxu0 0
        %419 = vmatpush1.bf16.msra.mxu0 0
        %420 = vmatprep.subr.bf16.mxu0 0
        %421 = vmatpush1.bf16.msra.mxu0 0
        %422 = vmatprep.subr.bf16.mxu0 0
        %423 = vmatpush1.bf16.msra.mxu0 0
        %424 = vmatprep.subr.bf16.mxu0 0
        %425 = vmatpush1.bf16.msra.mxu0 0
        %426 = vmatprep.subr.bf16.mxu0 0
        %427 = vmatpush1.bf16.msra.mxu0 0
        %428 = vmatprep.subr.bf16.mxu0 0
        %429 = vmatpush1.bf16.msra.mxu0 0
        %430 = vmatprep.subr.bf16.mxu0 0
        %431 = vmatpush1.bf16.msra.mxu0 0
        %432 = vmatprep.subr.bf16.mxu0 0
        %433 = vmatpush1.bf16.msra.mxu0 0
        %434 = vmatprep.subr.bf16.mxu0 0
        %435 = vmatpush1.bf16.msra.mxu0 0
        %436 = vmatprep.subr.bf16.mxu0 0
        %437 = vmatpush1.bf16.msra.mxu0 0
        %438 = vmatprep.subr.bf16.mxu0 0
        %439 = vmatpush1.bf16.msra.mxu0 0
        %440 = vmatprep.subr.bf16.mxu0 0
        %441 = vmatpush1.bf16.msra.mxu0 0
        %442 = vmatprep.mubr.bf16.mxu0 0
        %443 = vmatmul.mubr.bf16.gmra.mrb[0].mxu0 %v408
        %v444 = vpop.f32.mrb[0].mxu0
        %v445 = vadd.f32 %v394, %v444
        %v446 = vpop.f32.mrb[0].mxu0
        %v447 = vadd.f32 %v394, %v446
        %v448 = vpop.f32.mrb[0].mxu0
        %v449 = vadd.f32 %v399, %v448
        %v450 = vpop.f32.mrb[0].mxu0
        %v451 = vadd.f32 %v399, %v450
        %452 = vdwg.mxu0
        %v453 = vmax.f32 %v445, 0.0
        %v454 = vmax.f32 %v447, 0.0
        %v455 = vmax.f32 %v449, 0.0
        %v456 = vmax.f32 %v451, 0.0
        %457 = vrot.lane.b32.xlu0 %v453, 1
        %v458 = vpop.permute.xlu0 %457
        %459 = vrot.lane.b32.xlu0 %v455, 1
        %v460 = vpop.permute.xlu0 %459
        %461 = vrot.lane.b32.xlu0 %v454, 1
        %v462 = vpop.permute.xlu0 %461
        %463 = vrot.lane.b32.xlu0 %v456, 1
        %v464 = vpop.permute.xlu0 %463
        %vm465 = vcmp.lt.s32.totalorder %v356, 1
        %v466 = vsel %vm465, %v458, %v462
        %v467 = vsel %vm465, %v460, %v464
        %v468 = vsel %vm465, %v462, %v458
        %v469 = vsel %vm465, %v464, %v460
        %v470 = vmul.f32 %v468, %v362
        %v471 = vmul.f32 %v466, %v363
        %v472 = vmul.f32 %v469, %v362
        %v473 = vmul.f32 %v467, %v363
        %474 = vrot.lane.b32.xlu0 %v453, 127
        %v475 = vpop.permute.xlu0 %474
        %476 = vrot.lane.b32.xlu0 %v455, 127
        %v477 = vpop.permute.xlu0 %476
        %478 = vrot.lane.b32.xlu0 %v454, 127
        %v479 = vpop.permute.xlu0 %478
        %480 = vrot.lane.b32.xlu0 %v456, 127
        %v481 = vpop.permute.xlu0 %480
        %vm482 = vcmp.lt.s32.totalorder %v356, 127
        %v483 = vsel %vm482, %v475, %v479
        %v484 = vsel %vm482, %v477, %v481
        %v485 = vsel %vm482, %v479, %v475
        %v486 = vsel %vm482, %v481, %v477
        %v487 = vmul.f32 %v483, %v368
        %v488 = vmul.f32 %v485, %v369
        %v489 = vmul.f32 %v484, %v368
        %v490 = vmul.f32 %v486, %v369
        %492 = vset.pattern.permute.xlu0 0
        %493 = vperm.xlu0 %492, %v372
        %v494 = vpop.permute.xlu0 %493
        %497 = vset.pattern.permute.xlu0 0
        %498 = vperm.xlu0 %497, %v373
        %v499 = vpop.permute.xlu0 %498
        %v501 = vmul.f32 %v494, %v470
        %v502 = vmul.f32 %v494, %v471
        %v503 = vmul.f32 %v499, %v472
        %v504 = vmul.f32 %v499, %v473
        %505 = vset.pattern.permute.xlu0 1
        %506 = vperm.xlu0 %505, %v372
        %v507 = vpop.permute.xlu0 %506
        %509 = vset.pattern.permute.xlu0 1
        %510 = vperm.xlu0 %509, %v373
        %v511 = vpop.permute.xlu0 %510
        %v513 = vmul.f32 %v507, %v453
        %v514 = vmul.f32 %v507, %v454
        %v515 = vmul.f32 %v511, %v455
        %v516 = vmul.f32 %v511, %v456
        %v517 = vadd.f32 %v501, %v513
        %v518 = vadd.f32 %v502, %v514
        %v519 = vadd.f32 %v503, %v515
        %v520 = vadd.f32 %v504, %v516
        %521 = vset.pattern.permute.xlu0 2
        %522 = vperm.xlu0 %521, %v372
        %v523 = vpop.permute.xlu0 %522
        %525 = vset.pattern.permute.xlu0 2
        %526 = vperm.xlu0 %525, %v373
        %v527 = vpop.permute.xlu0 %526
        %v529 = vmul.f32 %v523, %v487
        %v530 = vmul.f32 %v523, %v488
        %v531 = vmul.f32 %v527, %v489
        %v532 = vmul.f32 %v527, %v490
        %v533 = vadd.f32 %v517, %v529
        %v534 = vadd.f32 %v518, %v530
        %v535 = vadd.f32 %v519, %v531
        %v536 = vadd.f32 %v520, %v532
        %538 = vset.pattern.permute.xlu0 0
        %539 = vperm.xlu0 %538, %v378
        %v540 = vpop.permute.xlu0 %539
        %543 = vset.pattern.permute.xlu0 0
        %544 = vperm.xlu0 %543, %v379
        %v545 = vpop.permute.xlu0 %544
        %v547 = vadd.f32 %v533, %v540
        %v548 = vadd.f32 %v534, %v540
        %v549 = vadd.f32 %v535, %v545
        %v550 = vadd.f32 %v536, %v545
        %v551 = vmax.f32 %v547, 0.0
        %v552 = vmax.f32 %v548, 0.0
        %v553 = vmax.f32 %v549, 0.0
        %v554 = vmax.f32 %v550, 0.0
        %v555 = vpack.c.bf16 %v553, %v551
        %v556 = vpack.c.bf16 %v554, %v552
        %558 = vset.pattern.permute.xlu0 0
        %559 = vperm.xlu0 %558, %v380
        %v560 = vpop.permute.xlu0 %559
        %563 = vset.pattern.permute.xlu0 0
        %564 = vperm.xlu0 %563, %v381
        %v565 = vpop.permute.xlu0 %564
        %v569 = vunpack.c.l.b16 %v374
        %v570 = vunpack.c.l.b16 %v375
        %v571 = vpack.c.b16 %v570, %v569
        %v573 = vsel %vm406, %v571, 0
        %575 = vmatprep.subr.bf16.mxu0 %v556
        %576 = vmatpush1.bf16.msra.mxu0 %v555
        %577 = vmatprep.subr.bf16.mxu0 0
        %578 = vmatpush1.bf16.msra.mxu0 0
        %579 = vmatprep.subr.bf16.mxu0 0
        %580 = vmatpush1.bf16.msra.mxu0 0
        %581 = vmatprep.subr.bf16.mxu0 0
        %582 = vmatpush1.bf16.msra.mxu0 0
        %583 = vmatprep.subr.bf16.mxu0 0
        %584 = vmatpush1.bf16.msra.mxu0 0
        %585 = vmatprep.subr.bf16.mxu0 0
        %586 = vmatpush1.bf16.msra.mxu0 0
        %587 = vmatprep.subr.bf16.mxu0 0
        %588 = vmatpush1.bf16.msra.mxu0 0
        %589 = vmatprep.subr.bf16.mxu0 0
        %590 = vmatpush1.bf16.msra.mxu0 0
        %591 = vmatprep.subr.bf16.mxu0 0
        %592 = vmatpush1.bf16.msra.mxu0 0
        %593 = vmatprep.subr.bf16.mxu0 0
        %594 = vmatpush1.bf16.msra.mxu0 0
        %595 = vmatprep.subr.bf16.mxu0 0
        %596 = vmatpush1.bf16.msra.mxu0 0
        %597 = vmatprep.subr.bf16.mxu0 0
        %598 = vmatpush1.bf16.msra.mxu0 0
        %599 = vmatprep.subr.bf16.mxu0 0
        %600 = vmatpush1.bf16.msra.mxu0 0
        %601 = vmatprep.subr.bf16.mxu0 0
        %602 = vmatpush1.bf16.msra.mxu0 0
        %603 = vmatprep.subr.bf16.mxu0 0
        %604 = vmatpush1.bf16.msra.mxu0 0
        %605 = vmatprep.subr.bf16.mxu0 0
        %606 = vmatpush1.bf16.msra.mxu0 0
        %607 = vmatprep.mubr.bf16.mxu0 0
        %608 = vmatmul.mubr.bf16.gmra.mrb[0].mxu0 %v573
        %v609 = vpop.f32.mrb[0].mxu0
        %v610 = vadd.f32 %v560, %v609
        %v611 = vpop.f32.mrb[0].mxu0
        %v612 = vadd.f32 %v560, %v611
        %v613 = vpop.f32.mrb[0].mxu0
        %v614 = vadd.f32 %v565, %v613
        %v615 = vpop.f32.mrb[0].mxu0
        %v616 = vadd.f32 %v565, %v615
        %617 = vdwg.mxu0
        %v618 = vmax.f32 %v610, 0.0
        %v619 = vmax.f32 %v612, 0.0
        %v620 = vmax.f32 %v614, 0.0
        %v621 = vmax.f32 %v616, 0.0
        %v622 = vadd.f32 %v618, %v619
        %623 = vadd.xlane.f32.xlu0 %v622
        %v624 = vpop.xlane.xlu0 %623
        %v625 = vadd.f32 %v620, %v621
        %626 = vadd.xlane.f32.xlu0 %v625
        %v627 = vpop.xlane.xlu0 %626
        %v628 = vrcp.pop 256.0
        %v629 = vmul.f32 %v624, %v628
        %v630 = vmul.f32 %v627, %v628
        %v632 = vsel %vm406, %v382, 0
        %634 = vmatprep.subr.mxu0 0.0
        %v635 = vand.u32 %v629, 4294901760
        %636 = vmatpush1.msra.mxu0 %v635
        %637 = vmatprep.subr.mxu0 0.0
        %v638 = vand.u32 %v630, 4294901760
        %639 = vmatpush1.msra.mxu0 %v638
        %640 = vmatprep.subr.mxu0 0.0
        %641 = vmatpush1.msra.mxu0 0.0
        %642 = vmatprep.subr.mxu0 0.0
        %643 = vmatpush1.msra.mxu0 0.0
        %644 = vmatprep.subr.mxu0 0.0
        %645 = vmatpush1.msra.mxu0 0.0
        %646 = vmatprep.subr.mxu0 0.0
        %647 = vmatpush1.msra.mxu0 0.0
        %648 = vmatprep.subr.mxu0 0.0
        %649 = vmatpush1.msra.mxu0 0.0
        %650 = vmatprep.subr.mxu0 0.0
        %651 = vmatpush1.msra.mxu0 0.0
        %652 = vmatprep.subr.mxu0 0.0
        %653 = vmatpush1.msra.mxu0 0.0
        %654 = vmatprep.subr.mxu0 0.0
        %655 = vmatpush1.msra.mxu0 0.0
        %656 = vmatprep.subr.mxu0 0.0
        %657 = vmatpush1.msra.mxu0 0.0
        %658 = vmatprep.subr.mxu0 0.0
        %659 = vmatpush1.msra.mxu0 0.0
        %660 = vmatprep.subr.mxu0 0.0
        %661 = vmatpush1.msra.mxu0 0.0
        %662 = vmatprep.subr.mxu0 0.0
        %663 = vmatpush1.msra.mxu0 0.0
        %664 = vmatprep.subr.mxu0 0.0
        %665 = vmatpush1.msra.mxu0 0.0
        %666 = vmatprep.subr.mxu0 0.0
        %667 = vmatpush1.msra.mxu0 0.0
        %668 = vmatprep.subr.mxu0 0.0
        %669 = vmatpush1.msra.mxu0 0.0
        %670 = vmatprep.subr.mxu0 0.0
        %671 = vmatpush1.msra.mxu0 0.0
        %672 = vmatprep.subr.mxu0 0.0
        %673 = vmatpush1.msra.mxu0 0.0
        %674 = vmatprep.subr.mxu0 0.0
        %675 = vmatpush1.msra.mxu0 0.0
        %676 = vmatprep.subr.mxu0 0.0
        %677 = vmatpush1.msra.mxu0 0.0
        %678 = vmatprep.subr.mxu0 0.0
        %679 = vmatpush1.msra.mxu0 0.0
        %680 = vmatprep.subr.mxu0 0.0
        %681 = vmatpush1.msra.mxu0 0.0
        %682 = vmatprep.subr.mxu0 0.0
        %683 = vmatpush1.msra.mxu0 0.0
        %684 = vmatprep.subr.mxu0 0.0
        %685 = vmatpush1.msra.mxu0 0.0
        %686 = vmatprep.subr.mxu0 0.0
        %687 = vmatpush1.msra.mxu0 0.0
        %688 = vmatprep.subr.mxu0 0.0
        %689 = vmatpush1.msra.mxu0 0.0
        %690 = vmatprep.subr.mxu0 0.0
        %691 = vmatpush1.msra.mxu0 0.0
        %692 = vmatprep.subr.mxu0 0.0
        %693 = vmatpush1.msra.mxu0 0.0
        %694 = vmatprep.subr.mxu0 0.0
        %695 = vmatpush1.msra.mxu0 0.0
        %696 = vmatprep.subr.mxu0 0.0
        %697 = vmatpush1.msra.mxu0 0.0
        %698 = vmatprep.subr.mxu0 0.0
        %699 = vmatpush1.msra.mxu0 0.0
        %700 = vmatprep.mubr.f32.mxu0 0.0
        %v701 = vand.u32 %v632, 4294901760
        %v702 = vsub.f32 %v632, %v701
        %v703 = vand.u32 %v702, 4294901760
        %v704 = vsub.f32 %v702, %v703
        %v705 = vand.u32 %v704, 4294901760
        %706 = vmatmul.mubr.f32.gmra.mrb[0].mxu0 %v705
        %v707 = vpop.f32.mrb[0].mxu0
        %v708 = vadd.f32 0.0, %v707
        %v709 = vpop.f32.mrb[0].mxu0
        %710 = vdwg.mxu0
        %711 = vmatprep.subr.mxu0 0.0
        %v712 = vand.u32 %v629, 4294901760
        %v713 = vsub.f32 %v629, %v712
        %v714 = vand.u32 %v713, 4294901760
        %v715 = vsub.f32 %v713, %v714
        %v716 = vand.u32 %v715, 4294901760
        %717 = vmatpush1.msra.mxu0 %v716
        %718 = vmatprep.subr.mxu0 0.0
        %v719 = vand.u32 %v630, 4294901760
        %v720 = vsub.f32 %v630, %v719
        %v721 = vand.u32 %v720, 4294901760
        %v722 = vsub.f32 %v720, %v721
        %v723 = vand.u32 %v722, 4294901760
        %724 = vmatpush1.msra.mxu0 %v723
        %725 = vmatprep.subr.mxu0 0.0
        %726 = vmatpush1.msra.mxu0 0.0
        %727 = vmatprep.subr.mxu0 0.0
        %728 = vmatpush1.msra.mxu0 0.0
        %729 = vmatprep.subr.mxu0 0.0
        %730 = vmatpush1.msra.mxu0 0.0
        %731 = vmatprep.subr.mxu0 0.0
        %732 = vmatpush1.msra.mxu0 0.0
        %733 = vmatprep.subr.mxu0 0.0
        %734 = vmatpush1.msra.mxu0 0.0
        %735 = vmatprep.subr.mxu0 0.0
        %736 = vmatpush1.msra.mxu0 0.0
        %737 = vmatprep.subr.mxu0 0.0
        %738 = vmatpush1.msra.mxu0 0.0
        %739 = vmatprep.subr.mxu0 0.0
        %740 = vmatpush1.msra.mxu0 0.0
        %741 = vmatprep.subr.mxu0 0.0
        %742 = vmatpush1.msra.mxu0 0.0
        %743 = vmatprep.subr.mxu0 0.0
        %744 = vmatpush1.msra.mxu0 0.0
        %745 = vmatprep.subr.mxu0 0.0
        %746 = vmatpush1.msra.mxu0 0.0
        %747 = vmatprep.subr.mxu0 0.0
        %748 = vmatpush1.msra.mxu0 0.0
        %749 = vmatprep.subr.mxu0 0.0
        %750 = vmatpush1.msra.mxu0 0.0
        %751 = vmatprep.subr.mxu0 0.0
        %752 = vmatpush1.msra.mxu0 0.0
        %753 = vmatprep.subr.mxu0 0.0
        %754 = vmatpush1.msra.mxu0 0.0
        %755 = vmatprep.subr.mxu0 0.0
        %756 = vmatpush1.msra.mxu0 0.0
        %757 = vmatprep.subr.mxu0 0.0
        %758 = vmatpush1.msra.mxu0 0.0
        %759 = vmatprep.subr.mxu0 0.0
        %760 = vmatpush1.msra.mxu0 0.0
        %761 = vmatprep.subr.mxu0 0.0
        %762 = vmatpush1.msra.mxu0 0.0
        %763 = vmatprep.subr.mxu0 0.0
        %764 = vmatpush1.msra.mxu0 0.0
        %765 = vmatprep.subr.mxu0 0.0
        %766 = vmatpush1.msra.mxu0 0.0
        %767 = vmatprep.subr.mxu0 0.0
        %768 = vmatpush1.msra.mxu0 0.0
        %769 = vmatprep.subr.mxu0 0.0
        %770 = vmatpush1.msra.mxu0 0.0
        %771 = vmatprep.subr.mxu0 0.0
        %772 = vmatpush1.msra.mxu0 0.0
        %773 = vmatprep.subr.mxu0 0.0
        %774 = vmatpush1.msra.mxu0 0.0
        %775 = vmatprep.subr.mxu0 0.0
        %776 = vmatpush1.msra.mxu0 0.0
        %777 = vmatprep.subr.mxu0 0.0
        %778 = vmatpush1.msra.mxu0 0.0
        %779 = vmatprep.subr.mxu0 0.0
        %780 = vmatpush1.msra.mxu0 0.0
        %781 = vmatprep.subr.mxu0 0.0
        %782 = vmatpush1.msra.mxu0 0.0
        %783 = vmatprep.subr.mxu0 0.0
        %784 = vmatpush1.msra.mxu0 0.0
        %785 = vmatprep.mubr.f32.mxu0 0.0
        %v786 = vand.u32 %v632, 4294901760
        %787 = vmatmul.mubr.f32.gmra.mrb[0].mxu0 %v786
        %v788 = vpop.f32.mrb[0].mxu0
        %v789 = vadd.f32 %v708, %v788
        %v790 = vpop.f32.mrb[0].mxu0
        %791 = vdwg.mxu0
        %792 = vmatprep.subr.mxu0 0.0
        %v793 = vand.u32 %v629, 4294901760
        %v794 = vsub.f32 %v629, %v793
        %795 = vmatpush1.msra.mxu0 %v794
        %796 = vmatprep.subr.mxu0 0.0
        %v797 = vand.u32 %v630, 4294901760
        %v798 = vsub.f32 %v630, %v797
        %799 = vmatpush1.msra.mxu0 %v798
        %800 = vmatprep.subr.mxu0 0.0
        %801 = vmatpush1.msra.mxu0 0.0
        %802 = vmatprep.subr.mxu0 0.0
        %803 = vmatpush1.msra.mxu0 0.0
        %804 = vmatprep.subr.mxu0 0.0
        %805 = vmatpush1.msra.mxu0 0.0
        %806 = vmatprep.subr.mxu0 0.0
        %807 = vmatpush1.msra.mxu0 0.0
        %808 = vmatprep.subr.mxu0 0.0
        %809 = vmatpush1.msra.mxu0 0.0
        %810 = vmatprep.subr.mxu0 0.0
        %811 = vmatpush1.msra.mxu0 0.0
        %812 = vmatprep.subr.mxu0 0.0
        %813 = vmatpush1.msra.mxu0 0.0
        %814 = vmatprep.subr.mxu0 0.0
        %815 = vmatpush1.msra.mxu0 0.0
        %816 = vmatprep.subr.mxu0 0.0
        %817 = vmatpush1.msra.mxu0 0.0
        %818 = vmatprep.subr.mxu0 0.0
        %819 = vmatpush1.msra.mxu0 0.0
        %820 = vmatprep.subr.mxu0 0.0
        %821 = vmatpush1.msra.mxu0 0.0
        %822 = vmatprep.subr.mxu0 0.0
        %823 = vmatpush1.msra.mxu0 0.0
        %824 = vmatprep.subr.mxu0 0.0
        %825 = vmatpush1.msra.mxu0 0.0
        %826 = vmatprep.subr.mxu0 0.0
        %827 = vmatpush1.msra.mxu0 0.0
        %828 = vmatprep.subr.mxu0 0.0
        %829 = vmatpush1.msra.mxu0 0.0
        %830 = vmatprep.subr.mxu0 0.0
        %831 = vmatpush1.msra.mxu0 0.0
        %832 = vmatprep.subr.mxu0 0.0
        %833 = vmatpush1.msra.mxu0 0.0
        %834 = vmatprep.subr.mxu0 0.0
        %835 = vmatpush1.msra.mxu0 0.0
        %836 = vmatprep.subr.mxu0 0.0
        %837 = vmatpush1.msra.mxu0 0.0
        %838 = vmatprep.subr.mxu0 0.0
        %839 = vmatpush1.msra.mxu0 0.0
        %840 = vmatprep.subr.mxu0 0.0
        %841 = vmatpush1.msra.mxu0 0.0
        %842 = vmatprep.subr.mxu0 0.0
        %843 = vmatpush1.msra.mxu0 0.0
        %844 = vmatprep.subr.mxu0 0.0
        %845 = vmatpush1.msra.mxu0 0.0
        %846 = vmatprep.subr.mxu0 0.0
        %847 = vmatpush1.msra.mxu0 0.0
        %848 = vmatprep.subr.mxu0 0.0
        %849 = vmatpush1.msra.mxu0 0.0
        %850 = vmatprep.subr.mxu0 0.0
        %851 = vmatpush1.msra.mxu0 0.0
        %852 = vmatprep.subr.mxu0 0.0
        %853 = vmatpush1.msra.mxu0 0.0
        %854 = vmatprep.subr.mxu0 0.0
        %855 = vmatpush1.msra.mxu0 0.0
        %856 = vmatprep.subr.mxu0 0.0
        %857 = vmatpush1.msra.mxu0 0.0
        %858 = vmatprep.subr.mxu0 0.0
        %859 = vmatpush1.msra.mxu0 0.0
        %860 = vmatprep.mubr.f32.mxu0 0.0
        %v861 = vand.u32 %v632, 4294901760
        %v862 = vsub.f32 %v632, %v861
        %863 = vmatmul.mubr.f32.gmra.mrb[0].mxu0 %v862
        %v864 = vpop.f32.mrb[0].mxu0
        %v865 = vadd.f32 %v789, %v864
        %v866 = vpop.f32.mrb[0].mxu0
        %867 = vdwg.mxu0
        %868 = vmatprep.subr.mxu0 0.0
        %v869 = vand.u32 %v629, 4294901760
        %870 = vmatpush1.msra.mxu0 %v869
        %871 = vmatprep.subr.mxu0 0.0
        %v872 = vand.u32 %v630, 4294901760
        %873 = vmatpush1.msra.mxu0 %v872
        %874 = vmatprep.subr.mxu0 0.0
        %875 = vmatpush1.msra.mxu0 0.0
        %876 = vmatprep.subr.mxu0 0.0
        %877 = vmatpush1.msra.mxu0 0.0
        %878 = vmatprep.subr.mxu0 0.0
        %879 = vmatpush1.msra.mxu0 0.0
        %880 = vmatprep.subr.mxu0 0.0
        %881 = vmatpush1.msra.mxu0 0.0
        %882 = vmatprep.subr.mxu0 0.0
        %883 = vmatpush1.msra.mxu0 0.0
        %884 = vmatprep.subr.mxu0 0.0
        %885 = vmatpush1.msra.mxu0 0.0
        %886 = vmatprep.subr.mxu0 0.0
        %887 = vmatpush1.msra.mxu0 0.0
        %888 = vmatprep.subr.mxu0 0.0
        %889 = vmatpush1.msra.mxu0 0.0
        %890 = vmatprep.subr.mxu0 0.0
        %891 = vmatpush1.msra.mxu0 0.0
        %892 = vmatprep.subr.mxu0 0.0
        %893 = vmatpush1.msra.mxu0 0.0
        %894 = vmatprep.subr.mxu0 0.0
        %895 = vmatpush1.msra.mxu0 0.0
        %896 = vmatprep.subr.mxu0 0.0
        %897 = vmatpush1.msra.mxu0 0.0
        %898 = vmatprep.subr.mxu0 0.0
        %899 = vmatpush1.msra.mxu0 0.0
        %900 = vmatprep.subr.mxu0 0.0
        %901 = vmatpush1.msra.mxu0 0.0
        %902 = vmatprep.subr.mxu0 0.0
        %903 = vmatpush1.msra.mxu0 0.0
        %904 = vmatprep.subr.mxu0 0.0
        %905 = vmatpush1.msra.mxu0 0.0
        %906 = vmatprep.subr.mxu0 0.0
        %907 = vmatpush1.msra.mxu0 0.0
        %908 = vmatprep.subr.mxu0 0.0
        %909 = vmatpush1.msra.mxu0 0.0
        %910 = vmatprep.subr.mxu0 0.0
        %911 = vmatpush1.msra.mxu0 0.0
        %912 = vmatprep.subr.mxu0 0.0
        %913 = vmatpush1.msra.mxu0 0.0
        %914 = vmatprep.subr.mxu0 0.0
        %915 = vmatpush1.msra.mxu0 0.0
        %916 = vmatprep.subr.mxu0 0.0
        %917 = vmatpush1.msra.mxu0 0.0
        %918 = vmatprep.subr.mxu0 0.0
        %919 = vmatpush1.msra.mxu0 0.0
        %920 = vmatprep.subr.mxu0 0.0
        %921 = vmatpush1.msra.mxu0 0.0
        %922 = vmatprep.subr.mxu0 0.0
        %923 = vmatpush1.msra.mxu0 0.0
        %924 = vmatprep.subr.mxu0 0.0
        %925 = vmatpush1.msra.mxu0 0.0
        %926 = vmatprep.subr.mxu0 0.0
        %927 = vmatpush1.msra.mxu0 0.0
        %928 = vmatprep.subr.mxu0 0.0
        %929 = vmatpush1.msra.mxu0 0.0
        %930 = vmatprep.subr.mxu0 0.0
        %931 = vmatpush1.msra.mxu0 0.0
        %932 = vmatprep.subr.mxu0 0.0
        %933 = vmatpush1.msra.mxu0 0.0
        %934 = vmatprep.mubr.f32.mxu0 0.0
        %v935 = vand.u32 %v632, 4294901760
        %v936 = vsub.f32 %v632, %v935
        %v937 = vand.u32 %v936, 4294901760
        %938 = vmatmul.mubr.f32.gmra.mrb[0].mxu0 %v937
        %v939 = vpop.f32.mrb[0].mxu0
        %v940 = vadd.f32 %v865, %v939
        %v941 = vpop.f32.mrb[0].mxu0
        %942 = vdwg.mxu0
        %943 = vmatprep.subr.mxu0 0.0
        %v944 = vand.u32 %v629, 4294901760
        %v945 = vsub.f32 %v629, %v944
        %v946 = vand.u32 %v945, 4294901760
        %947 = vmatpush1.msra.mxu0 %v946
        %948 = vmatprep.subr.mxu0 0.0
        %v949 = vand.u32 %v630, 4294901760
        %v950 = vsub.f32 %v630, %v949
        %v951 = vand.u32 %v950, 4294901760
        %952 = vmatpush1.msra.mxu0 %v951
        %953 = vmatprep.subr.mxu0 0.0
        %954 = vmatpush1.msra.mxu0 0.0
        %955 = vmatprep.subr.mxu0 0.0
        %956 = vmatpush1.msra.mxu0 0.0
        %957 = vmatprep.subr.mxu0 0.0
        %958 = vmatpush1.msra.mxu0 0.0
        %959 = vmatprep.subr.mxu0 0.0
        %960 = vmatpush1.msra.mxu0 0.0
        %961 = vmatprep.subr.mxu0 0.0
        %962 = vmatpush1.msra.mxu0 0.0
        %963 = vmatprep.subr.mxu0 0.0
        %964 = vmatpush1.msra.mxu0 0.0
        %965 = vmatprep.subr.mxu0 0.0
        %966 = vmatpush1.msra.mxu0 0.0
        %967 = vmatprep.subr.mxu0 0.0
        %968 = vmatpush1.msra.mxu0 0.0
        %969 = vmatprep.subr.mxu0 0.0
        %970 = vmatpush1.msra.mxu0 0.0
        %971 = vmatprep.subr.mxu0 0.0
        %972 = vmatpush1.msra.mxu0 0.0
        %973 = vmatprep.subr.mxu0 0.0
        %974 = vmatpush1.msra.mxu0 0.0
        %975 = vmatprep.subr.mxu0 0.0
        %976 = vmatpush1.msra.mxu0 0.0
        %977 = vmatprep.subr.mxu0 0.0
        %978 = vmatpush1.msra.mxu0 0.0
        %979 = vmatprep.subr.mxu0 0.0
        %980 = vmatpush1.msra.mxu0 0.0
        %981 = vmatprep.subr.mxu0 0.0
        %982 = vmatpush1.msra.mxu0 0.0
        %983 = vmatprep.subr.mxu0 0.0
        %984 = vmatpush1.msra.mxu0 0.0
        %985 = vmatprep.subr.mxu0 0.0
        %986 = vmatpush1.msra.mxu0 0.0
        %987 = vmatprep.subr.mxu0 0.0
        %988 = vmatpush1.msra.mxu0 0.0
        %989 = vmatprep.subr.mxu0 0.0
        %990 = vmatpush1.msra.mxu0 0.0
        %991 = vmatprep.subr.mxu0 0.0
        %992 = vmatpush1.msra.mxu0 0.0
        %993 = vmatprep.subr.mxu0 0.0
        %994 = vmatpush1.msra.mxu0 0.0
        %995 = vmatprep.subr.mxu0 0.0
        %996 = vmatpush1.msra.mxu0 0.0
        %997 = vmatprep.subr.mxu0 0.0
        %998 = vmatpush1.msra.mxu0 0.0
        %999 = vmatprep.subr.mxu0 0.0
        %1000 = vmatpush1.msra.mxu0 0.0
        %1001 = vmatprep.subr.mxu0 0.0
        %1002 = vmatpush1.msra.mxu0 0.0
        %1003 = vmatprep.subr.mxu0 0.0
        %1004 = vmatpush1.msra.mxu0 0.0
        %1005 = vmatprep.subr.mxu0 0.0
        %1006 = vmatpush1.msra.mxu0 0.0
        %1007 = vmatprep.subr.mxu0 0.0
        %1008 = vmatpush1.msra.mxu0 0.0
        %1009 = vmatprep.subr.mxu0 0.0
        %1010 = vmatpush1.msra.mxu0 0.0
        %1011 = vmatprep.subr.mxu0 0.0
        %1012 = vmatpush1.msra.mxu0 0.0
        %1013 = vmatprep.mubr.f32.mxu0 0.0
        %v1014 = vand.u32 %v632, 4294901760
        %1015 = vmatmul.mubr.f32.gmra.mrb[0].mxu0 %v1014
        %v1016 = vpop.f32.mrb[0].mxu0
        %v1017 = vadd.f32 %v940, %v1016
        %v1018 = vpop.f32.mrb[0].mxu0
        %1019 = vdwg.mxu0
        %1020 = vmatprep.subr.mxu0 0.0
        %v1021 = vand.u32 %v629, 4294901760
        %1022 = vmatpush1.msra.mxu0 %v1021
        %1023 = vmatprep.subr.mxu0 0.0
        %v1024 = vand.u32 %v630, 4294901760
        %1025 = vmatpush1.msra.mxu0 %v1024
        %1026 = vmatprep.subr.mxu0 0.0
        %1027 = vmatpush1.msra.mxu0 0.0
        %1028 = vmatprep.subr.mxu0 0.0
        %1029 = vmatpush1.msra.mxu0 0.0
        %1030 = vmatprep.subr.mxu0 0.0
        %1031 = vmatpush1.msra.mxu0 0.0
        %1032 = vmatprep.subr.mxu0 0.0
        %1033 = vmatpush1.msra.mxu0 0.0
        %1034 = vmatprep.subr.mxu0 0.0
        %1035 = vmatpush1.msra.mxu0 0.0
        %1036 = vmatprep.subr.mxu0 0.0
        %1037 = vmatpush1.msra.mxu0 0.0
        %1038 = vmatprep.subr.mxu0 0.0
        %1039 = vmatpush1.msra.mxu0 0.0
        %1040 = vmatprep.subr.mxu0 0.0
        %1041 = vmatpush1.msra.mxu0 0.0
        %1042 = vmatprep.subr.mxu0 0.0
        %1043 = vmatpush1.msra.mxu0 0.0
        %1044 = vmatprep.subr.mxu0 0.0
        %1045 = vmatpush1.msra.mxu0 0.0
        %1046 = vmatprep.subr.mxu0 0.0
        %1047 = vmatpush1.msra.mxu0 0.0
        %1048 = vmatprep.subr.mxu0 0.0
        %1049 = vmatpush1.msra.mxu0 0.0
        %1050 = vmatprep.subr.mxu0 0.0
        %1051 = vmatpush1.msra.mxu0 0.0
        %1052 = vmatprep.subr.mxu0 0.0
        %1053 = vmatpush1.msra.mxu0 0.0
        %1054 = vmatprep.subr.mxu0 0.0
        %1055 = vmatpush1.msra.mxu0 0.0
        %1056 = vmatprep.subr.mxu0 0.0
        %1057 = vmatpush1.msra.mxu0 0.0
        %1058 = vmatprep.subr.mxu0 0.0
        %1059 = vmatpush1.msra.mxu0 0.0
        %1060 = vmatprep.subr.mxu0 0.0
        %1061 = vmatpush1.msra.mxu0 0.0
        %1062 = vmatprep.subr.mxu0 0.0
        %1063 = vmatpush1.msra.mxu0 0.0
        %1064 = vmatprep.subr.mxu0 0.0
        %1065 = vmatpush1.msra.mxu0 0.0
        %1066 = vmatprep.subr.mxu0 0.0
        %1067 = vmatpush1.msra.mxu0 0.0
        %1068 = vmatprep.subr.mxu0 0.0
        %1069 = vmatpush1.msra.mxu0 0.0
        %1070 = vmatprep.subr.mxu0 0.0
        %1071 = vmatpush1.msra.mxu0 0.0
        %1072 = vmatprep.subr.mxu0 0.0
        %1073 = vmatpush1.msra.mxu0 0.0
        %1074 = vmatprep.subr.mxu0 0.0
        %1075 = vmatpush1.msra.mxu0 0.0
        %1076 = vmatprep.subr.mxu0 0.0
        %1077 = vmatpush1.msra.mxu0 0.0
        %1078 = vmatprep.subr.mxu0 0.0
        %1079 = vmatpush1.msra.mxu0 0.0
        %1080 = vmatprep.subr.mxu0 0.0
        %1081 = vmatpush1.msra.mxu0 0.0
        %1082 = vmatprep.subr.mxu0 0.0
        %1083 = vmatpush1.msra.mxu0 0.0
        %1084 = vmatprep.subr.mxu0 0.0
        %1085 = vmatpush1.msra.mxu0 0.0
        %1086 = vmatprep.mubr.f32.mxu0 0.0
        %v1087 = vand.u32 %v632, 4294901760
        %1088 = vmatmul.mubr.f32.gmra.mrb[0].mxu0 %v1087
        %v1089 = vpop.f32.mrb[0].mxu0
        %v1090 = vadd.f32 %v1017, %v1089
        %v1091 = vpop.f32.mrb[0].mxu0
        %1092 = vdwg.mxu0
        %v1093 = vmax.f32 %v1090, 0.0
        %vm1094 = vcmask 15360
        %v1096 = vsel %vm1094, %v383, 0
        %v1099 = vsel %vm1094, %v384, 0
        %vm1101 = vcmask 1041408
        %v1103 = vsel %vm1101, %v1093, 0
        %1105 = vmatprep.subr.mxu0 0.0
        %v1106 = vand.u32 %v1103, 4294901760
        %1107 = vmatpush1.msra.mxu0 %v1106
        %1108 = vmatprep.subr.mxu0 0.0
        %1109 = vmatpush1.msra.mxu0 0.0
        %1110 = vmatprep.subr.mxu0 0.0
        %1111 = vmatpush1.msra.mxu0 0.0
        %1112 = vmatprep.subr.mxu0 0.0
        %1113 = vmatpush1.msra.mxu0 0.0
        %1114 = vmatprep.subr.mxu0 0.0
        %1115 = vmatpush1.msra.mxu0 0.0
        %1116 = vmatprep.subr.mxu0 0.0
        %1117 = vmatpush1.msra.mxu0 0.0
        %1118 = vmatprep.subr.mxu0 0.0
        %1119 = vmatpush1.msra.mxu0 0.0
        %1120 = vmatprep.subr.mxu0 0.0
        %1121 = vmatpush1.msra.mxu0 0.0
        %1122 = vmatprep.subr.mxu0 0.0
        %1123 = vmatpush1.msra.mxu0 0.0
        %1124 = vmatprep.subr.mxu0 0.0
        %1125 = vmatpush1.msra.mxu0 0.0
        %1126 = vmatprep.subr.mxu0 0.0
        %1127 = vmatpush1.msra.mxu0 0.0
        %1128 = vmatprep.subr.mxu0 0.0
        %1129 = vmatpush1.msra.mxu0 0.0
        %1130 = vmatprep.subr.mxu0 0.0
        %1131 = vmatpush1.msra.mxu0 0.0
        %1132 = vmatprep.subr.mxu0 0.0
        %1133 = vmatpush1.msra.mxu0 0.0
        %1134 = vmatprep.subr.mxu0 0.0
        %1135 = vmatpush1.msra.mxu0 0.0
        %1136 = vmatprep.subr.mxu0 0.0
        %1137 = vmatpush1.msra.mxu0 0.0
        %1138 = vmatprep.subr.mxu0 0.0
        %1139 = vmatpush1.msra.mxu0 0.0
        %1140 = vmatprep.subr.mxu0 0.0
        %1141 = vmatpush1.msra.mxu0 0.0
        %1142 = vmatprep.subr.mxu0 0.0
        %1143 = vmatpush1.msra.mxu0 0.0
        %1144 = vmatprep.subr.mxu0 0.0
        %1145 = vmatpush1.msra.mxu0 0.0
        %1146 = vmatprep.subr.mxu0 0.0
        %1147 = vmatpush1.msra.mxu0 0.0
        %1148 = vmatprep.subr.mxu0 0.0
        %1149 = vmatpush1.msra.mxu0 0.0
        %1150 = vmatprep.subr.mxu0 0.0
        %1151 = vmatpush1.msra.mxu0 0.0
        %1152 = vmatprep.subr.mxu0 0.0
        %1153 = vmatpush1.msra.mxu0 0.0
        %1154 = vmatprep.subr.mxu0 0.0
        %1155 = vmatpush1.msra.mxu0 0.0
        %1156 = vmatprep.subr.mxu0 0.0
        %1157 = vmatpush1.msra.mxu0 0.0
        %1158 = vmatprep.subr.mxu0 0.0
        %1159 = vmatpush1.msra.mxu0 0.0
        %1160 = vmatprep.subr.mxu0 0.0
        %1161 = vmatpush1.msra.mxu0 0.0
        %1162 = vmatprep.subr.mxu0 0.0
        %1163 = vmatpush1.msra.mxu0 0.0
        %1164 = vmatprep.subr.mxu0 0.0
        %1165 = vmatpush1.msra.mxu0 0.0
        %1166 = vmatprep.subr.mxu0 0.0
        %1167 = vmatpush1.msra.mxu0 0.0
        %1168 = vmatprep.subr.mxu0 0.0
        %1169 = vmatpush1.msra.mxu0 0.0
        %1170 = vmatprep.mubr.f32.mxu0 0.0
        %v1171 = vand.u32 %v1096, 4294901760
        %v1172 = vsub.f32 %v1096, %v1171
        %v1173 = vand.u32 %v1172, 4294901760
        %v1174 = vsub.f32 %v1172, %v1173
        %v1175 = vand.u32 %v1174, 4294901760
        %1176 = vmatmul.mubr.f32.gmra.mrb[0].mxu0 %v1175
        %v1177 = vpop.f32.mrb[0].mxu0
        %v1178 = vadd.f32 0.0, %v1177
        %v1179 = vpop.f32.mrb[0].mxu0
        %1180 = vmatprep.mubr.f32.mxu0 0.0
        %v1181 = vand.u32 %v1099, 4294901760
        %v1182 = vsub.f32 %v1099, %v1181
        %v1183 = vand.u32 %v1182, 4294901760
        %v1184 = vsub.f32 %v1182, %v1183
        %v1185 = vand.u32 %v1184, 4294901760
        %1186 = vmatmul.mubr.f32.gmra.mrb[0].mxu0 %v1185
        %v1187 = vpop.f32.mrb[0].mxu0
        %v1188 = vadd.f32 0.0, %v1187
        %v1189 = vpop.f32.mrb[0].mxu0
        %1190 = vdwg.mxu0
        %1191 = vmatprep.subr.mxu0 0.0
        %v1192 = vand.u32 %v1103, 4294901760
        %v1193 = vsub.f32 %v1103, %v1192
        %v1194 = vand.u32 %v1193, 4294901760
        %v1195 = vsub.f32 %v1193, %v1194
        %v1196 = vand.u32 %v1195, 4294901760
        %1197 = vmatpush1.msra.mxu0 %v1196
        %1198 = vmatprep.subr.mxu0 0.0
        %1199 = vmatpush1.msra.mxu0 0.0
        %1200 = vmatprep.subr.mxu0 0.0
        %1201 = vmatpush1.msra.mxu0 0.0
        %1202 = vmatprep.subr.mxu0 0.0
        %1203 = vmatpush1.msra.mxu0 0.0
        %1204 = vmatprep.subr.mxu0 0.0
        %1205 = vmatpush1.msra.mxu0 0.0
        %1206 = vmatprep.subr.mxu0 0.0
        %1207 = vmatpush1.msra.mxu0 0.0
        %1208 = vmatprep.subr.mxu0 0.0
        %1209 = vmatpush1.msra.mxu0 0.0
        %1210 = vmatprep.subr.mxu0 0.0
        %1211 = vmatpush1.msra.mxu0 0.0
        %1212 = vmatprep.subr.mxu0 0.0
        %1213 = vmatpush1.msra.mxu0 0.0
        %1214 = vmatprep.subr.mxu0 0.0
        %1215 = vmatpush1.msra.mxu0 0.0
        %1216 = vmatprep.subr.mxu0 0.0
        %1217 = vmatpush1.msra.mxu0 0.0
        %1218 = vmatprep.subr.mxu0 0.0
        %1219 = vmatpush1.msra.mxu0 0.0
        %1220 = vmatprep.subr.mxu0 0.0
        %1221 = vmatpush1.msra.mxu0 0.0
        %1222 = vmatprep.subr.mxu0 0.0
        %1223 = vmatpush1.msra.mxu0 0.0
        %1224 = vmatprep.subr.mxu0 0.0
        %1225 = vmatpush1.msra.mxu0 0.0
        %1226 = vmatprep.subr.mxu0 0.0
        %1227 = vmatpush1.msra.mxu0 0.0
        %1228 = vmatprep.subr.mxu0 0.0
        %1229 = vmatpush1.msra.mxu0 0.0
        %1230 = vmatprep.subr.mxu0 0.0
        %1231 = vmatpush1.msra.mxu0 0.0
        %1232 = vmatprep.subr.mxu0 0.0
        %1233 = vmatpush1.msra.mxu0 0.0
        %1234 = vmatprep.subr.mxu0 0.0
        %1235 = vmatpush1.msra.mxu0 0.0
        %1236 = vmatprep.subr.mxu0 0.0
        %1237 = vmatpush1.msra.mxu0 0.0
        %1238 = vmatprep.subr.mxu0 0.0
        %1239 = vmatpush1.msra.mxu0 0.0
        %1240 = vmatprep.subr.mxu0 0.0
        %1241 = vmatpush1.msra.mxu0 0.0
        %1242 = vmatprep.subr.mxu0 0.0
        %1243 = vmatpush1.msra.mxu0 0.0
        %1244 = vmatprep.subr.mxu0 0.0
        %1245 = vmatpush1.msra.mxu0 0.0
        %1246 = vmatprep.subr.mxu0 0.0
        %1247 = vmatpush1.msra.mxu0 0.0
        %1248 = vmatprep.subr.mxu0 0.0
        %1249 = vmatpush1.msra.mxu0 0.0
        %1250 = vmatprep.subr.mxu0 0.0
        %1251 = vmatpush1.msra.mxu0 0.0
        %1252 = vmatprep.subr.mxu0 0.0
        %1253 = vmatpush1.msra.mxu0 0.0
        %1254 = vmatprep.subr.mxu0 0.0
        %1255 = vmatpush1.msra.mxu0 0.0
        %1256 = vmatprep.subr.mxu0 0.0
        %1257 = vmatpush1.msra.mxu0 0.0
        %1258 = vmatprep.subr.mxu0 0.0
        %1259 = vmatpush1.msra.mxu0 0.0
        %1260 = vmatprep.mubr.f32.mxu0 0.0
        %v1261 = vand.u32 %v1096, 4294901760
        %1262 = vmatmul.mubr.f32.gmra.mrb[0].mxu0 %v1261
        %v1263 = vpop.f32.mrb[0].mxu0
        %v1264 = vadd.f32 %v1178, %v1263
        %v1265 = vpop.f32.mrb[0].mxu0
        %1266 = vmatprep.mubr.f32.mxu0 0.0
        %v1267 = vand.u32 %v1099, 4294901760
        %1268 = vmatmul.mubr.f32.gmra.mrb[0].mxu0 %v1267
        %v1269 = vpop.f32.mrb[0].mxu0
        %v1270 = vadd.f32 %v1188, %v1269
        %v1271 = vpop.f32.mrb[0].mxu0
        %1272 = vdwg.mxu0
        %1273 = vmatprep.subr.mxu0 0.0
        %v1274 = vand.u32 %v1103, 4294901760
        %v1275 = vsub.f32 %v1103, %v1274
        %1276 = vmatpush1.msra.mxu0 %v1275
        %1277 = vmatprep.subr.mxu0 0.0
        %1278 = vmatpush1.msra.mxu0 0.0
        %1279 = vmatprep.subr.mxu0 0.0
        %1280 = vmatpush1.msra.mxu0 0.0
        %1281 = vmatprep.subr.mxu0 0.0
        %1282 = vmatpush1.msra.mxu0 0.0
        %1283 = vmatprep.subr.mxu0 0.0
        %1284 = vmatpush1.msra.mxu0 0.0
        %1285 = vmatprep.subr.mxu0 0.0
        %1286 = vmatpush1.msra.mxu0 0.0
        %1287 = vmatprep.subr.mxu0 0.0
        %1288 = vmatpush1.msra.mxu0 0.0
        %1289 = vmatprep.subr.mxu0 0.0
        %1290 = vmatpush1.msra.mxu0 0.0
        %1291 = vmatprep.subr.mxu0 0.0
        %1292 = vmatpush1.msra.mxu0 0.0
        %1293 = vmatprep.subr.mxu0 0.0
        %1294 = vmatpush1.msra.mxu0 0.0
        %1295 = vmatprep.subr.mxu0 0.0
        %1296 = vmatpush1.msra.mxu0 0.0
        %1297 = vmatprep.subr.mxu0 0.0
        %1298 = vmatpush1.msra.mxu0 0.0
        %1299 = vmatprep.subr.mxu0 0.0
        %1300 = vmatpush1.msra.mxu0 0.0
        %1301 = vmatprep.subr.mxu0 0.0
        %1302 = vmatpush1.msra.mxu0 0.0
        %1303 = vmatprep.subr.mxu0 0.0
        %1304 = vmatpush1.msra.mxu0 0.0
        %1305 = vmatprep.subr.mxu0 0.0
        %1306 = vmatpush1.msra.mxu0 0.0
        %1307 = vmatprep.subr.mxu0 0.0
        %1308 = vmatpush1.msra.mxu0 0.0
        %1309 = vmatprep.subr.mxu0 0.0
        %1310 = vmatpush1.msra.mxu0 0.0
        %1311 = vmatprep.subr.mxu0 0.0
        %1312 = vmatpush1.msra.mxu0 0.0
        %1313 = vmatprep.subr.mxu0 0.0
        %1314 = vmatpush1.msra.mxu0 0.0
        %1315 = vmatprep.subr.mxu0 0.0
        %1316 = vmatpush1.msra.mxu0 0.0
        %1317 = vmatprep.subr.mxu0 0.0
        %1318 = vmatpush1.msra.mxu0 0.0
        %1319 = vmatprep.subr.mxu0 0.0
        %1320 = vmatpush1.msra.mxu0 0.0
        %1321 = vmatprep.subr.mxu0 0.0
        %1322 = vmatpush1.msra.mxu0 0.0
        %1323 = vmatprep.subr.mxu0 0.0
        %1324 = vmatpush1.msra.mxu0 0.0
        %1325 = vmatprep.subr.mxu0 0.0
        %1326 = vmatpush1.msra.mxu0 0.0
        %1327 = vmatprep.subr.mxu0 0.0
        %1328 = vmatpush1.msra.mxu0 0.0
        %1329 = vmatprep.subr.mxu0 0.0
        %1330 = vmatpush1.msra.mxu0 0.0
        %1331 = vmatprep.subr.mxu0 0.0
        %1332 = vmatpush1.msra.mxu0 0.0
        %1333 = vmatprep.subr.mxu0 0.0
        %1334 = vmatpush1.msra.mxu0 0.0
        %1335 = vmatprep.subr.mxu0 0.0
        %1336 = vmatpush1.msra.mxu0 0.0
        %1337 = vmatprep.subr.mxu0 0.0
        %1338 = vmatpush1.msra.mxu0 0.0
        %1339 = vmatprep.mubr.f32.mxu0 0.0
        %v1340 = vand.u32 %v1096, 4294901760
        %v1341 = vsub.f32 %v1096, %v1340
        %1342 = vmatmul.mubr.f32.gmra.mrb[0].mxu0 %v1341
        %v1343 = vpop.f32.mrb[0].mxu0
        %v1344 = vadd.f32 %v1264, %v1343
        %v1345 = vpop.f32.mrb[0].mxu0
        %1346 = vmatprep.mubr.f32.mxu0 0.0
        %v1347 = vand.u32 %v1099, 4294901760
        %v1348 = vsub.f32 %v1099, %v1347
        %1349 = vmatmul.mubr.f32.gmra.mrb[0].mxu0 %v1348
        %v1350 = vpop.f32.mrb[0].mxu0
        %v1351 = vadd.f32 %v1270, %v1350
        %v1352 = vpop.f32.mrb[0].mxu0
        %1353 = vdwg.mxu0
        %1354 = vmatprep.subr.mxu0 0.0
        %v1355 = vand.u32 %v1103, 4294901760
        %1356 = vmatpush1.msra.mxu0 %v1355
        %1357 = vmatprep.subr.mxu0 0.0
        %1358 = vmatpush1.msra.mxu0 0.0
        %1359 = vmatprep.subr.mxu0 0.0
        %1360 = vmatpush1.msra.mxu0 0.0
        %1361 = vmatprep.subr.mxu0 0.0
        %1362 = vmatpush1.msra.mxu0 0.0
        %1363 = vmatprep.subr.mxu0 0.0
        %1364 = vmatpush1.msra.mxu0 0.0
        %1365 = vmatprep.subr.mxu0 0.0
        %1366 = vmatpush1.msra.mxu0 0.0
        %1367 = vmatprep.subr.mxu0 0.0
        %1368 = vmatpush1.msra.mxu0 0.0
        %1369 = vmatprep.subr.mxu0 0.0
        %1370 = vmatpush1.msra.mxu0 0.0
        %1371 = vmatprep.subr.mxu0 0.0
        %1372 = vmatpush1.msra.mxu0 0.0
        %1373 = vmatprep.subr.mxu0 0.0
        %1374 = vmatpush1.msra.mxu0 0.0
        %1375 = vmatprep.subr.mxu0 0.0
        %1376 = vmatpush1.msra.mxu0 0.0
        %1377 = vmatprep.subr.mxu0 0.0
        %1378 = vmatpush1.msra.mxu0 0.0
        %1379 = vmatprep.subr.mxu0 0.0
        %1380 = vmatpush1.msra.mxu0 0.0
        %1381 = vmatprep.subr.mxu0 0.0
        %1382 = vmatpush1.msra.mxu0 0.0
        %1383 = vmatprep.subr.mxu0 0.0
        %1384 = vmatpush1.msra.mxu0 0.0
        %1385 = vmatprep.subr.mxu0 0.0
        %1386 = vmatpush1.msra.mxu0 0.0
        %1387 = vmatprep.subr.mxu0 0.0
        %1388 = vmatpush1.msra.mxu0 0.0
        %1389 = vmatprep.subr.mxu0 0.0
        %1390 = vmatpush1.msra.mxu0 0.0
        %1391 = vmatprep.subr.mxu0 0.0
        %1392 = vmatpush1.msra.mxu0 0.0
        %1393 = vmatprep.subr.mxu0 0.0
        %1394 = vmatpush1.msra.mxu0 0.0
        %1395 = vmatprep.subr.mxu0 0.0
        %1396 = vmatpush1.msra.mxu0 0.0
        %1397 = vmatprep.subr.mxu0 0.0
        %1398 = vmatpush1.msra.mxu0 0.0
        %1399 = vmatprep.subr.mxu0 0.0
        %1400 = vmatpush1.msra.mxu0 0.0
        %1401 = vmatprep.subr.mxu0 0.0
        %1402 = vmatpush1.msra.mxu0 0.0
        %1403 = vmatprep.subr.mxu0 0.0
        %1404 = vmatpush1.msra.mxu0 0.0
        %1405 = vmatprep.subr.mxu0 0.0
        %1406 = vmatpush1.msra.mxu0 0.0
        %1407 = vmatprep.subr.mxu0 0.0
        %1408 = vmatpush1.msra.mxu0 0.0
        %1409 = vmatprep.subr.mxu0 0.0
        %1410 = vmatpush1.msra.mxu0 0.0
        %1411 = vmatprep.subr.mxu0 0.0
        %1412 = vmatpush1.msra.mxu0 0.0
        %1413 = vmatprep.subr.mxu0 0.0
        %1414 = vmatpush1.msra.mxu0 0.0
        %1415 = vmatprep.subr.mxu0 0.0
        %1416 = vmatpush1.msra.mxu0 0.0
        %1417 = vmatprep.subr.mxu0 0.0
        %1418 = vmatpush1.msra.mxu0 0.0
        %1419 = vmatprep.mubr.f32.mxu0 0.0
        %v1420 = vand.u32 %v1096, 4294901760
        %v1421 = vsub.f32 %v1096, %v1420
        %v1422 = vand.u32 %v1421, 4294901760
        %1423 = vmatmul.mubr.f32.gmra.mrb[0].mxu0 %v1422
        %v1424 = vpop.f32.mrb[0].mxu0
        %v1425 = vadd.f32 %v1344, %v1424
        %v1426 = vpop.f32.mrb[0].mxu0
        %1427 = vmatprep.mubr.f32.mxu0 0.0
        %v1428 = vand.u32 %v1099, 4294901760
        %v1429 = vsub.f32 %v1099, %v1428
        %v1430 = vand.u32 %v1429, 4294901760
        %1431 = vmatmul.mubr.f32.gmra.mrb[0].mxu0 %v1430
        %v1432 = vpop.f32.mrb[0].mxu0
        %v1433 = vadd.f32 %v1351, %v1432
        %v1434 = vpop.f32.mrb[0].mxu0
        %1435 = vdwg.mxu0
        %1436 = vmatprep.subr.mxu0 0.0
        %v1437 = vand.u32 %v1103, 4294901760
        %v1438 = vsub.f32 %v1103, %v1437
        %v1439 = vand.u32 %v1438, 4294901760
        %1440 = vmatpush1.msra.mxu0 %v1439
        %1441 = vmatprep.subr.mxu0 0.0
        %1442 = vmatpush1.msra.mxu0 0.0
        %1443 = vmatprep.subr.mxu0 0.0
        %1444 = vmatpush1.msra.mxu0 0.0
        %1445 = vmatprep.subr.mxu0 0.0
        %1446 = vmatpush1.msra.mxu0 0.0
        %1447 = vmatprep.subr.mxu0 0.0
        %1448 = vmatpush1.msra.mxu0 0.0
        %1449 = vmatprep.subr.mxu0 0.0
        %1450 = vmatpush1.msra.mxu0 0.0
        %1451 = vmatprep.subr.mxu0 0.0
        %1452 = vmatpush1.msra.mxu0 0.0
        %1453 = vmatprep.subr.mxu0 0.0
        %1454 = vmatpush1.msra.mxu0 0.0
        %1455 = vmatprep.subr.mxu0 0.0
        %1456 = vmatpush1.msra.mxu0 0.0
        %1457 = vmatprep.subr.mxu0 0.0
        %1458 = vmatpush1.msra.mxu0 0.0
        %1459 = vmatprep.subr.mxu0 0.0
        %1460 = vmatpush1.msra.mxu0 0.0
        %1461 = vmatprep.subr.mxu0 0.0
        %1462 = vmatpush1.msra.mxu0 0.0
        %1463 = vmatprep.subr.mxu0 0.0
        %1464 = vmatpush1.msra.mxu0 0.0
        %1465 = vmatprep.subr.mxu0 0.0
        %1466 = vmatpush1.msra.mxu0 0.0
        %1467 = vmatprep.subr.mxu0 0.0
        %1468 = vmatpush1.msra.mxu0 0.0
        %1469 = vmatprep.subr.mxu0 0.0
        %1470 = vmatpush1.msra.mxu0 0.0
        %1471 = vmatprep.subr.mxu0 0.0
        %1472 = vmatpush1.msra.mxu0 0.0
        %1473 = vmatprep.subr.mxu0 0.0
        %1474 = vmatpush1.msra.mxu0 0.0
        %1475 = vmatprep.subr.mxu0 0.0
        %1476 = vmatpush1.msra.mxu0 0.0
        %1477 = vmatprep.subr.mxu0 0.0
        %1478 = vmatpush1.msra.mxu0 0.0
        %1479 = vmatprep.subr.mxu0 0.0
        %1480 = vmatpush1.msra.mxu0 0.0
        %1481 = vmatprep.subr.mxu0 0.0
        %1482 = vmatpush1.msra.mxu0 0.0
        %1483 = vmatprep.subr.mxu0 0.0
        %1484 = vmatpush1.msra.mxu0 0.0
        %1485 = vmatprep.subr.mxu0 0.0
        %1486 = vmatpush1.msra.mxu0 0.0
        %1487 = vmatprep.subr.mxu0 0.0
        %1488 = vmatpush1.msra.mxu0 0.0
        %1489 = vmatprep.subr.mxu0 0.0
        %1490 = vmatpush1.msra.mxu0 0.0
        %1491 = vmatprep.subr.mxu0 0.0
        %1492 = vmatpush1.msra.mxu0 0.0
        %1493 = vmatprep.subr.mxu0 0.0
        %1494 = vmatpush1.msra.mxu0 0.0
        %1495 = vmatprep.subr.mxu0 0.0
        %1496 = vmatpush1.msra.mxu0 0.0
        %1497 = vmatprep.subr.mxu0 0.0
        %1498 = vmatpush1.msra.mxu0 0.0
        %1499 = vmatprep.subr.mxu0 0.0
        %1500 = vmatpush1.msra.mxu0 0.0
        %1501 = vmatprep.subr.mxu0 0.0
        %1502 = vmatpush1.msra.mxu0 0.0
        %1503 = vmatprep.mubr.f32.mxu0 0.0
        %v1504 = vand.u32 %v1096, 4294901760
        %1505 = vmatmul.mubr.f32.gmra.mrb[0].mxu0 %v1504
        %v1506 = vpop.f32.mrb[0].mxu0
        %v1507 = vadd.f32 %v1425, %v1506
        %v1508 = vpop.f32.mrb[0].mxu0
        %1509 = vmatprep.mubr.f32.mxu0 0.0
        %v1510 = vand.u32 %v1099, 4294901760
        %1511 = vmatmul.mubr.f32.gmra.mrb[0].mxu0 %v1510
        %v1512 = vpop.f32.mrb[0].mxu0
        %v1513 = vadd.f32 %v1433, %v1512
        %v1514 = vpop.f32.mrb[0].mxu0
        %1515 = vdwg.mxu0
        %1516 = vmatprep.subr.mxu0 0.0
        %v1517 = vand.u32 %v1103, 4294901760
        %1518 = vmatpush1.msra.mxu0 %v1517
        %1519 = vmatprep.subr.mxu0 0.0
        %1520 = vmatpush1.msra.mxu0 0.0
        %1521 = vmatprep.subr.mxu0 0.0
        %1522 = vmatpush1.msra.mxu0 0.0
        %1523 = vmatprep.subr.mxu0 0.0
        %1524 = vmatpush1.msra.mxu0 0.0
        %1525 = vmatprep.subr.mxu0 0.0
        %1526 = vmatpush1.msra.mxu0 0.0
        %1527 = vmatprep.subr.mxu0 0.0
        %1528 = vmatpush1.msra.mxu0 0.0
        %1529 = vmatprep.subr.mxu0 0.0
        %1530 = vmatpush1.msra.mxu0 0.0
        %1531 = vmatprep.subr.mxu0 0.0
        %1532 = vmatpush1.msra.mxu0 0.0
        %1533 = vmatprep.subr.mxu0 0.0
        %1534 = vmatpush1.msra.mxu0 0.0
        %1535 = vmatprep.subr.mxu0 0.0
        %1536 = vmatpush1.msra.mxu0 0.0
        %1537 = vmatprep.subr.mxu0 0.0
        %1538 = vmatpush1.msra.mxu0 0.0
        %1539 = vmatprep.subr.mxu0 0.0
        %1540 = vmatpush1.msra.mxu0 0.0
        %1541 = vmatprep.subr.mxu0 0.0
        %1542 = vmatpush1.msra.mxu0 0.0
        %1543 = vmatprep.subr.mxu0 0.0
        %1544 = vmatpush1.msra.mxu0 0.0
        %1545 = vmatprep.subr.mxu0 0.0
        %1546 = vmatpush1.msra.mxu0 0.0
        %1547 = vmatprep.subr.mxu0 0.0
        %1548 = vmatpush1.msra.mxu0 0.0
        %1549 = vmatprep.subr.mxu0 0.0
        %1550 = vmatpush1.msra.mxu0 0.0
        %1551 = vmatprep.subr.mxu0 0.0
        %1552 = vmatpush1.msra.mxu0 0.0
        %1553 = vmatprep.subr.mxu0 0.0
        %1554 = vmatpush1.msra.mxu0 0.0
        %1555 = vmatprep.subr.mxu0 0.0
        %1556 = vmatpush1.msra.mxu0 0.0
        %1557 = vmatprep.subr.mxu0 0.0
        %1558 = vmatpush1.msra.mxu0 0.0
        %1559 = vmatprep.subr.mxu0 0.0
        %1560 = vmatpush1.msra.mxu0 0.0
        %1561 = vmatprep.subr.mxu0 0.0
        %1562 = vmatpush1.msra.mxu0 0.0
        %1563 = vmatprep.subr.mxu0 0.0
        %1564 = vmatpush1.msra.mxu0 0.0
        %1565 = vmatprep.subr.mxu0 0.0
        %1566 = vmatpush1.msra.mxu0 0.0
        %1567 = vmatprep.subr.mxu0 0.0
        %1568 = vmatpush1.msra.mxu0 0.0
        %1569 = vmatprep.subr.mxu0 0.0
        %1570 = vmatpush1.msra.mxu0 0.0
        %1571 = vmatprep.subr.mxu0 0.0
        %1572 = vmatpush1.msra.mxu0 0.0
        %1573 = vmatprep.subr.mxu0 0.0
        %1574 = vmatpush1.msra.mxu0 0.0
        %1575 = vmatprep.subr.mxu0 0.0
        %1576 = vmatpush1.msra.mxu0 0.0
        %1577 = vmatprep.subr.mxu0 0.0
        %1578 = vmatpush1.msra.mxu0 0.0
        %1579 = vmatprep.subr.mxu0 0.0
        %1580 = vmatpush1.msra.mxu0 0.0
        %1581 = vmatprep.mubr.f32.mxu0 0.0
        %v1582 = vand.u32 %v1096, 4294901760
        %1583 = vmatmul.mubr.f32.gmra.mrb[0].mxu0 %v1582
        %v1584 = vpop.f32.mrb[0].mxu0
        %v1585 = vadd.f32 %v1507, %v1584
        %v1586 = vpop.f32.mrb[0].mxu0
        %1587 = vmatprep.mubr.f32.mxu0 0.0
        %v1588 = vand.u32 %v1099, 4294901760
        %1589 = vmatmul.mubr.f32.gmra.mrb[0].mxu0 %v1588
        %v1590 = vpop.f32.mrb[0].mxu0
        %v1591 = vadd.f32 %v1513, %v1590
        %v1592 = vpop.f32.mrb[0].mxu0
        %1593 = vdwg.mxu0
        %v1594 = vxor.u32 %v1585, 2147483648
        %v1595 = vxor.u32 %v1591, 2147483648
        %v1596 = vmul.f32 %v1594, 1.442695
        %v1597 = vpow.pop %v1596
        %v1598 = vmul.f32 %v1595, 1.442695
        %v1599 = vpow.pop %v1598
        %v1600 = vadd.f32 %v1597, 1.0
        %v1601 = vadd.f32 %v1599, 1.0
        %v1602 = vrcp.pop %v1600
        %v1603 = vmul.f32 1.0, %v1602
        %v1604 = vrcp.pop %v1601
        %v1605 = vmul.f32 1.0, %v1604
        %1607 = vset.pattern.permute.xlu0 0
        %1608 = vperm.xlu0 %1607, %v1603
        %v1609 = vpop.permute.xlu0 %1608
        %1612 = vset.pattern.permute.xlu0 0
        %1613 = vperm.xlu0 %1612, %v1605
        %v1614 = vpop.permute.xlu0 %1613
        %v1616 = vmul.f32 %v618, %v1609
        %v1617 = vmul.f32 %v619, %v1609
        %v1618 = vmul.f32 %v620, %v1614
        %v1619 = vmul.f32 %v621, %v1614
        %v1620 = vadd.f32 %v1616, %v385
        %v1621 = vadd.f32 %v1617, %v386
        %v1622 = vadd.f32 %v1618, %v387
        %v1623 = vadd.f32 %v1619, %v388
        %1624 = vst [vmem:[%s351] sm:$0xff] %v1620
        %1625 = vst [vmem:[%s351 + $0x8] sm:$0xff] %v1621
        %1626 = vst [vmem:[%s351 + $0x10] sm:$0xff] %v1622
        %1627 = vst [vmem:[%s351 + $0x18] sm:$0xff] %v1623
        %s1628 = scalar_lea.vmem %s317, 32 [#allocation2]
        %v1629 = vld [vmem:[%s1628] sm:$0xff]
        %v1630 = vld [vmem:[%s1628 + $0x8] sm:$0xff]
        %v1631 = vld [vmem:[%s1628 + $0x10] sm:$0xff]
        %v1632 = vld [vmem:[%s1628 + $0x18] sm:$0xff]
        %v1633 = vpack.c.bf16 %v1631, %v1629
        %v1634 = vpack.c.bf16 %v1632, %v1630
        %1635 = vmatprep.subr.bf16.mxu0 %v1634
        %1636 = vmatpush1.bf16.msra.mxu0 %v1633
        %1637 = vmatprep.subr.bf16.mxu0 0
        %1638 = vmatpush1.bf16.msra.mxu0 0
        %1639 = vmatprep.subr.bf16.mxu0 0
        %1640 = vmatpush1.bf16.msra.mxu0 0
        %1641 = vmatprep.subr.bf16.mxu0 0
        %1642 = vmatpush1.bf16.msra.mxu0 0
        %1643 = vmatprep.subr.bf16.mxu0 0
        %1644 = vmatpush1.bf16.msra.mxu0 0
        %1645 = vmatprep.subr.bf16.mxu0 0
        %1646 = vmatpush1.bf16.msra.mxu0 0
        %1647 = vmatprep.subr.bf16.mxu0 0
        %1648 = vmatpush1.bf16.msra.mxu0 0
        %1649 = vmatprep.subr.bf16.mxu0 0
        %1650 = vmatpush1.bf16.msra.mxu0 0
        %1651 = vmatprep.subr.bf16.mxu0 0
        %1652 = vmatpush1.bf16.msra.mxu0 0
        %1653 = vmatprep.subr.bf16.mxu0 0
        %1654 = vmatpush1.bf16.msra.mxu0 0
        %1655 = vmatprep.subr.bf16.mxu0 0
        %1656 = vmatpush1.bf16.msra.mxu0 0
        %1657 = vmatprep.subr.bf16.mxu0 0
        %1658 = vmatpush1.bf16.msra.mxu0 0
        %1659 = vmatprep.subr.bf16.mxu0 0
        %1660 = vmatpush1.bf16.msra.mxu0 0
        %1661 = vmatprep.subr.bf16.mxu0 0
        %1662 = vmatpush1.bf16.msra.mxu0 0
        %1663 = vmatprep.subr.bf16.mxu0 0
        %1664 = vmatpush1.bf16.msra.mxu0 0
        %1665 = vmatprep.subr.bf16.mxu0 0
        %1666 = vmatpush1.bf16.msra.mxu0 0
        %1667 = vmatprep.mubr.bf16.mxu0 0
        %1668 = vmatmul.mubr.bf16.gmra.mrb[0].mxu0 %v408
        %v1669 = vpop.f32.mrb[0].mxu0
        %v1670 = vadd.f32 %v394, %v1669
        %v1671 = vpop.f32.mrb[0].mxu0
        %v1672 = vadd.f32 %v394, %v1671
        %v1673 = vpop.f32.mrb[0].mxu0
        %v1674 = vadd.f32 %v399, %v1673
        %v1675 = vpop.f32.mrb[0].mxu0
        %v1676 = vadd.f32 %v399, %v1675
        %1677 = vdwg.mxu0
        %v1678 = vmax.f32 %v1670, 0.0
        %v1679 = vmax.f32 %v1672, 0.0
        %v1680 = vmax.f32 %v1674, 0.0
        %v1681 = vmax.f32 %v1676, 0.0
        %1682 = vrot.lane.b32.xlu0 %v1678, 1
        %v1683 = vpop.permute.xlu0 %1682
        %1684 = vrot.lane.b32.xlu0 %v1680, 1
        %v1685 = vpop.permute.xlu0 %1684
        %1686 = vrot.lane.b32.xlu0 %v1679, 1
        %v1687 = vpop.permute.xlu0 %1686
        %1688 = vrot.lane.b32.xlu0 %v1681, 1
        %v1689 = vpop.permute.xlu0 %1688
        %v1690 = vsel %vm465, %v1683, %v1687
        %v1691 = vsel %vm465, %v1685, %v1689
        %v1692 = vsel %vm465, %v1687, %v1683
        %v1693 = vsel %vm465, %v1689, %v1685
        %v1694 = vmul.f32 %v1692, %v362
        %v1695 = vmul.f32 %v1690, %v363
        %v1696 = vmul.f32 %v1693, %v362
        %v1697 = vmul.f32 %v1691, %v363
        %1698 = vrot.lane.b32.xlu0 %v1678, 127
        %v1699 = vpop.permute.xlu0 %1698
        %1700 = vrot.lane.b32.xlu0 %v1680, 127
        %v1701 = vpop.permute.xlu0 %1700
        %1702 = vrot.lane.b32.xlu0 %v1679, 127
        %v1703 = vpop.permute.xlu0 %1702
        %1704 = vrot.lane.b32.xlu0 %v1681, 127
        %v1705 = vpop.permute.xlu0 %1704
        %v1706 = vsel %vm482, %v1699, %v1703
        %v1707 = vsel %vm482, %v1701, %v1705
        %v1708 = vsel %vm482, %v1703, %v1699
        %v1709 = vsel %vm482, %v1705, %v1701
        %v1710 = vmul.f32 %v1706, %v368
        %v1711 = vmul.f32 %v1708, %v369
        %v1712 = vmul.f32 %v1707, %v368
        %v1713 = vmul.f32 %v1709, %v369
        %v1714 = vmul.f32 %v494, %v1694
        %v1715 = vmul.f32 %v494, %v1695
        %v1716 = vmul.f32 %v499, %v1696
        %v1717 = vmul.f32 %v499, %v1697
        %v1718 = vmul.f32 %v507, %v1678
        %v1719 = vmul.f32 %v507, %v1679
        %v1720 = vmul.f32 %v511, %v1680
        %v1721 = vmul.f32 %v511, %v1681
        %v1722 = vadd.f32 %v1714, %v1718
        %v1723 = vadd.f32 %v1715, %v1719
        %v1724 = vadd.f32 %v1716, %v1720
        %v1725 = vadd.f32 %v1717, %v1721
        %v1726 = vmul.f32 %v523, %v1710
        %v1727 = vmul.f32 %v523, %v1711
        %v1728 = vmul.f32 %v527, %v1712
        %v1729 = vmul.f32 %v527, %v1713
        %v1730 = vadd.f32 %v1722, %v1726
        %v1731 = vadd.f32 %v1723, %v1727
        %v1732 = vadd.f32 %v1724, %v1728
        %v1733 = vadd.f32 %v1725, %v1729
        %v1734 = vadd.f32 %v1730, %v540
        %v1735 = vadd.f32 %v1731, %v540
        %v1736 = vadd.f32 %v1732, %v545
        %v1737 = vadd.f32 %v1733, %v545
        %v1738 = vmax.f32 %v1734, 0.0
        %v1739 = vmax.f32 %v1735, 0.0
        %v1740 = vmax.f32 %v1736, 0.0
        %v1741 = vmax.f32 %v1737, 0.0
        %v1742 = vpack.c.bf16 %v1740, %v1738
        %v1743 = vpack.c.bf16 %v1741, %v1739
        %1744 = vmatprep.subr.bf16.mxu0 %v1743
        %1745 = vmatpush1.bf16.msra.mxu0 %v1742
        %1746 = vmatprep.subr.bf16.mxu0 0
        %1747 = vmatpush1.bf16.msra.mxu0 0
        %1748 = vmatprep.subr.bf16.mxu0 0
        %1749 = vmatpush1.bf16.msra.mxu0 0
        %1750 = vmatprep.subr.bf16.mxu0 0
        %1751 = vmatpush1.bf16.msra.mxu0 0
        %1752 = vmatprep.subr.bf16.mxu0 0
        %1753 = vmatpush1.bf16.msra.mxu0 0
        %1754 = vmatprep.subr.bf16.mxu0 0
        %1755 = vmatpush1.bf16.msra.mxu0 0
        %1756 = vmatprep.subr.bf16.mxu0 0
        %1757 = vmatpush1.bf16.msra.mxu0 0
        %1758 = vmatprep.subr.bf16.mxu0 0
        %1759 = vmatpush1.bf16.msra.mxu0 0
        %1760 = vmatprep.subr.bf16.mxu0 0
        %1761 = vmatpush1.bf16.msra.mxu0 0
        %1762 = vmatprep.subr.bf16.mxu0 0
        %1763 = vmatpush1.bf16.msra.mxu0 0
        %1764 = vmatprep.subr.bf16.mxu0 0
        %1765 = vmatpush1.bf16.msra.mxu0 0
        %1766 = vmatprep.subr.bf16.mxu0 0
        %1767 = vmatpush1.bf16.msra.mxu0 0
        %1768 = vmatprep.subr.bf16.mxu0 0
        %1769 = vmatpush1.bf16.msra.mxu0 0
        %1770 = vmatprep.subr.bf16.mxu0 0
        %1771 = vmatpush1.bf16.msra.mxu0 0
        %1772 = vmatprep.subr.bf16.mxu0 0
        %1773 = vmatpush1.bf16.msra.mxu0 0
        %1774 = vmatprep.subr.bf16.mxu0 0
        %1775 = vmatpush1.bf16.msra.mxu0 0
        %1776 = vmatprep.mubr.bf16.mxu0 0
        %1777 = vmatmul.mubr.bf16.gmra.mrb[0].mxu0 %v573
        %v1778 = vpop.f32.mrb[0].mxu0
        %v1779 = vadd.f32 %v560, %v1778
        %v1780 = vpop.f32.mrb[0].mxu0
        %v1781 = vadd.f32 %v560, %v1780
        %v1782 = vpop.f32.mrb[0].mxu0
        %v1783 = vadd.f32 %v565, %v1782
        %v1784 = vpop.f32.mrb[0].mxu0
        %v1785 = vadd.f32 %v565, %v1784
        %1786 = vdwg.mxu0
        %v1787 = vmax.f32 %v1779, 0.0
        %v1788 = vmax.f32 %v1781, 0.0
        %v1789 = vmax.f32 %v1783, 0.0
        %v1790 = vmax.f32 %v1785, 0.0
        %v1791 = vadd.f32 %v1787, %v1788
        %1792 = vadd.xlane.f32.xlu0 %v1791
        %v1793 = vpop.xlane.xlu0 %1792
        %v1794 = vadd.f32 %v1789, %v1790
        %1795 = vadd.xlane.f32.xlu0 %v1794
        %v1796 = vpop.xlane.xlu0 %1795
        %v1797 = vmul.f32 %v1793, %v628
        %v1798 = vmul.f32 %v1796, %v628
        %1799 = vmatprep.subr.mxu0 0.0
        %v1800 = vand.u32 %v1797, 4294901760
        %1801 = vmatpush1.msra.mxu0 %v1800
        %1802 = vmatprep.subr.mxu0 0.0
        %v1803 = vand.u32 %v1798, 4294901760
        %1804 = vmatpush1.msra.mxu0 %v1803
        %1805 = vmatprep.subr.mxu0 0.0
        %1806 = vmatpush1.msra.mxu0 0.0
        %1807 = vmatprep.subr.mxu0 0.0
        %1808 = vmatpush1.msra.mxu0 0.0
        %1809 = vmatprep.subr.mxu0 0.0
        %1810 = vmatpush1.msra.mxu0 0.0
        %1811 = vmatprep.subr.mxu0 0.0
        %1812 = vmatpush1.msra.mxu0 0.0
        %1813 = vmatprep.subr.mxu0 0.0
        %1814 = vmatpush1.msra.mxu0 0.0
        %1815 = vmatprep.subr.mxu0 0.0
        %1816 = vmatpush1.msra.mxu0 0.0
        %1817 = vmatprep.subr.mxu0 0.0
        %1818 = vmatpush1.msra.mxu0 0.0
        %1819 = vmatprep.subr.mxu0 0.0
        %1820 = vmatpush1.msra.mxu0 0.0
        %1821 = vmatprep.subr.mxu0 0.0
        %1822 = vmatpush1.msra.mxu0 0.0
        %1823 = vmatprep.subr.mxu0 0.0
        %1824 = vmatpush1.msra.mxu0 0.0
        %1825 = vmatprep.subr.mxu0 0.0
        %1826 = vmatpush1.msra.mxu0 0.0
        %1827 = vmatprep.subr.mxu0 0.0
        %1828 = vmatpush1.msra.mxu0 0.0
        %1829 = vmatprep.subr.mxu0 0.0
        %1830 = vmatpush1.msra.mxu0 0.0
        %1831 = vmatprep.subr.mxu0 0.0
        %1832 = vmatpush1.msra.mxu0 0.0
        %1833 = vmatprep.subr.mxu0 0.0
        %1834 = vmatpush1.msra.mxu0 0.0
        %1835 = vmatprep.subr.mxu0 0.0
        %1836 = vmatpush1.msra.mxu0 0.0
        %1837 = vmatprep.subr.mxu0 0.0
        %1838 = vmatpush1.msra.mxu0 0.0
        %1839 = vmatprep.subr.mxu0 0.0
        %1840 = vmatpush1.msra.mxu0 0.0
        %1841 = vmatprep.subr.mxu0 0.0
        %1842 = vmatpush1.msra.mxu0 0.0
        %1843 = vmatprep.subr.mxu0 0.0
        %1844 = vmatpush1.msra.mxu0 0.0
        %1845 = vmatprep.subr.mxu0 0.0
        %1846 = vmatpush1.msra.mxu0 0.0
        %1847 = vmatprep.subr.mxu0 0.0
        %1848 = vmatpush1.msra.mxu0 0.0
        %1849 = vmatprep.subr.mxu0 0.0
        %1850 = vmatpush1.msra.mxu0 0.0
        %1851 = vmatprep.subr.mxu0 0.0
        %1852 = vmatpush1.msra.mxu0 0.0
        %1853 = vmatprep.subr.mxu0 0.0
        %1854 = vmatpush1.msra.mxu0 0.0
        %1855 = vmatprep.subr.mxu0 0.0
        %1856 = vmatpush1.msra.mxu0 0.0
        %1857 = vmatprep.subr.mxu0 0.0
        %1858 = vmatpush1.msra.mxu0 0.0
        %1859 = vmatprep.subr.mxu0 0.0
        %1860 = vmatpush1.msra.mxu0 0.0
        %1861 = vmatprep.subr.mxu0 0.0
        %1862 = vmatpush1.msra.mxu0 0.0
        %1863 = vmatprep.subr.mxu0 0.0
        %1864 = vmatpush1.msra.mxu0 0.0
        %1865 = vmatprep.mubr.f32.mxu0 0.0
        %v1866 = vand.u32 %v632, 4294901760
        %v1867 = vsub.f32 %v632, %v1866
        %v1868 = vand.u32 %v1867, 4294901760
        %v1869 = vsub.f32 %v1867, %v1868
        %v1870 = vand.u32 %v1869, 4294901760
        %1871 = vmatmul.mubr.f32.gmra.mrb[0].mxu0 %v1870
        %v1872 = vpop.f32.mrb[0].mxu0
        %v1873 = vadd.f32 0.0, %v1872
        %v1874 = vpop.f32.mrb[0].mxu0
        %1875 = vdwg.mxu0
        %1876 = vmatprep.subr.mxu0 0.0
        %v1877 = vand.u32 %v1797, 4294901760
        %v1878 = vsub.f32 %v1797, %v1877
        %v1879 = vand.u32 %v1878, 4294901760
        %v1880 = vsub.f32 %v1878, %v1879
        %v1881 = vand.u32 %v1880, 4294901760
        %1882 = vmatpush1.msra.mxu0 %v1881
        %1883 = vmatprep.subr.mxu0 0.0
        %v1884 = vand.u32 %v1798, 4294901760
        %v1885 = vsub.f32 %v1798, %v1884
        %v1886 = vand.u32 %v1885, 4294901760
        %v1887 = vsub.f32 %v1885, %v1886
        %v1888 = vand.u32 %v1887, 4294901760
        %1889 = vmatpush1.msra.mxu0 %v1888
        %1890 = vmatprep.subr.mxu0 0.0
        %1891 = vmatpush1.msra.mxu0 0.0
        %1892 = vmatprep.subr.mxu0 0.0
        %1893 = vmatpush1.msra.mxu0 0.0
        %1894 = vmatprep.subr.mxu0 0.0
        %1895 = vmatpush1.msra.mxu0 0.0
        %1896 = vmatprep.subr.mxu0 0.0
        %1897 = vmatpush1.msra.mxu0 0.0
        %1898 = vmatprep.subr.mxu0 0.0
        %1899 = vmatpush1.msra.mxu0 0.0
        %1900 = vmatprep.subr.mxu0 0.0
        %1901 = vmatpush1.msra.mxu0 0.0
        %1902 = vmatprep.subr.mxu0 0.0
        %1903 = vmatpush1.msra.mxu0 0.0
        %1904 = vmatprep.subr.mxu0 0.0
        %1905 = vmatpush1.msra.mxu0 0.0
        %1906 = vmatprep.subr.mxu0 0.0
        %1907 = vmatpush1.msra.mxu0 0.0
        %1908 = vmatprep.subr.mxu0 0.0
        %1909 = vmatpush1.msra.mxu0 0.0
        %1910 = vmatprep.subr.mxu0 0.0
        %1911 = vmatpush1.msra.mxu0 0.0
        %1912 = vmatprep.subr.mxu0 0.0
        %1913 = vmatpush1.msra.mxu0 0.0
        %1914 = vmatprep.subr.mxu0 0.0
        %1915 = vmatpush1.msra.mxu0 0.0
        %1916 = vmatprep.subr.mxu0 0.0
        %1917 = vmatpush1.msra.mxu0 0.0
        %1918 = vmatprep.subr.mxu0 0.0
        %1919 = vmatpush1.msra.mxu0 0.0
        %1920 = vmatprep.subr.mxu0 0.0
        %1921 = vmatpush1.msra.mxu0 0.0
        %1922 = vmatprep.subr.mxu0 0.0
        %1923 = vmatpush1.msra.mxu0 0.0
        %1924 = vmatprep.subr.mxu0 0.0
        %1925 = vmatpush1.msra.mxu0 0.0
        %1926 = vmatprep.subr.mxu0 0.0
        %1927 = vmatpush1.msra.mxu0 0.0
        %1928 = vmatprep.subr.mxu0 0.0
        %1929 = vmatpush1.msra.mxu0 0.0
        %1930 = vmatprep.subr.mxu0 0.0
        %1931 = vmatpush1.msra.mxu0 0.0
        %1932 = vmatprep.subr.mxu0 0.0
        %1933 = vmatpush1.msra.mxu0 0.0
        %1934 = vmatprep.subr.mxu0 0.0
        %1935 = vmatpush1.msra.mxu0 0.0
        %1936 = vmatprep.subr.mxu0 0.0
        %1937 = vmatpush1.msra.mxu0 0.0
        %1938 = vmatprep.subr.mxu0 0.0
        %1939 = vmatpush1.msra.mxu0 0.0
        %1940 = vmatprep.subr.mxu0 0.0
        %1941 = vmatpush1.msra.mxu0 0.0
        %1942 = vmatprep.subr.mxu0 0.0
        %1943 = vmatpush1.msra.mxu0 0.0
        %1944 = vmatprep.subr.mxu0 0.0
        %1945 = vmatpush1.msra.mxu0 0.0
        %1946 = vmatprep.subr.mxu0 0.0
        %1947 = vmatpush1.msra.mxu0 0.0
        %1948 = vmatprep.subr.mxu0 0.0
        %1949 = vmatpush1.msra.mxu0 0.0
        %1950 = vmatprep.mubr.f32.mxu0 0.0
        %v1951 = vand.u32 %v632, 4294901760
        %1952 = vmatmul.mubr.f32.gmra.mrb[0].mxu0 %v1951
        %v1953 = vpop.f32.mrb[0].mxu0
        %v1954 = vadd.f32 %v1873, %v1953
        %v1955 = vpop.f32.mrb[0].mxu0
        %1956 = vdwg.mxu0
        %1957 = vmatprep.subr.mxu0 0.0
        %v1958 = vand.u32 %v1797, 4294901760
        %v1959 = vsub.f32 %v1797, %v1958
        %1960 = vmatpush1.msra.mxu0 %v1959
        %1961 = vmatprep.subr.mxu0 0.0
        %v1962 = vand.u32 %v1798, 4294901760
        %v1963 = vsub.f32 %v1798, %v1962
        %1964 = vmatpush1.msra.mxu0 %v1963
        %1965 = vmatprep.subr.mxu0 0.0
        %1966 = vmatpush1.msra.mxu0 0.0
        %1967 = vmatprep.subr.mxu0 0.0
        %1968 = vmatpush1.msra.mxu0 0.0
        %1969 = vmatprep.subr.mxu0 0.0
        %1970 = vmatpush1.msra.mxu0 0.0
        %1971 = vmatprep.subr.mxu0 0.0
        %1972 = vmatpush1.msra.mxu0 0.0
        %1973 = vmatprep.subr.mxu0 0.0
        %1974 = vmatpush1.msra.mxu0 0.0
        %1975 = vmatprep.subr.mxu0 0.0
        %1976 = vmatpush1.msra.mxu0 0.0
        %1977 = vmatprep.subr.mxu0 0.0
        %1978 = vmatpush1.msra.mxu0 0.0
        %1979 = vmatprep.subr.mxu0 0.0
        %1980 = vmatpush1.msra.mxu0 0.0
        %1981 = vmatprep.subr.mxu0 0.0
        %1982 = vmatpush1.msra.mxu0 0.0
        %1983 = vmatprep.subr.mxu0 0.0
        %1984 = vmatpush1.msra.mxu0 0.0
        %1985 = vmatprep.subr.mxu0 0.0
        %1986 = vmatpush1.msra.mxu0 0.0
        %1987 = vmatprep.subr.mxu0 0.0
        %1988 = vmatpush1.msra.mxu0 0.0
        %1989 = vmatprep.subr.mxu0 0.0
        %1990 = vmatpush1.msra.mxu0 0.0
        %1991 = vmatprep.subr.mxu0 0.0
        %1992 = vmatpush1.msra.mxu0 0.0
        %1993 = vmatprep.subr.mxu0 0.0
        %1994 = vmatpush1.msra.mxu0 0.0
        %1995 = vmatprep.subr.mxu0 0.0
        %1996 = vmatpush1.msra.mxu0 0.0
        %1997 = vmatprep.subr.mxu0 0.0
        %1998 = vmatpush1.msra.mxu0 0.0
        %1999 = vmatprep.subr.mxu0 0.0
        %2000 = vmatpush1.msra.mxu0 0.0
        %2001 = vmatprep.subr.mxu0 0.0
        %2002 = vmatpush1.msra.mxu0 0.0
        %2003 = vmatprep.subr.mxu0 0.0
        %2004 = vmatpush1.msra.mxu0 0.0
        %2005 = vmatprep.subr.mxu0 0.0
        %2006 = vmatpush1.msra.mxu0 0.0
        %2007 = vmatprep.subr.mxu0 0.0
        %2008 = vmatpush1.msra.mxu0 0.0
        %2009 = vmatprep.subr.mxu0 0.0
        %2010 = vmatpush1.msra.mxu0 0.0
        %2011 = vmatprep.subr.mxu0 0.0
        %2012 = vmatpush1.msra.mxu0 0.0
        %2013 = vmatprep.subr.mxu0 0.0
        %2014 = vmatpush1.msra.mxu0 0.0
        %2015 = vmatprep.subr.mxu0 0.0
        %2016 = vmatpush1.msra.mxu0 0.0
        %2017 = vmatprep.subr.mxu0 0.0
        %2018 = vmatpush1.msra.mxu0 0.0
        %2019 = vmatprep.subr.mxu0 0.0
        %2020 = vmatpush1.msra.mxu0 0.0
        %2021 = vmatprep.subr.mxu0 0.0
        %2022 = vmatpush1.msra.mxu0 0.0
        %2023 = vmatprep.subr.mxu0 0.0
        %2024 = vmatpush1.msra.mxu0 0.0
        %2025 = vmatprep.mubr.f32.mxu0 0.0
        %v2026 = vand.u32 %v632, 4294901760
        %v2027 = vsub.f32 %v632, %v2026
        %2028 = vmatmul.mubr.f32.gmra.mrb[0].mxu0 %v2027
        %v2029 = vpop.f32.mrb[0].mxu0
        %v2030 = vadd.f32 %v1954, %v2029
        %v2031 = vpop.f32.mrb[0].mxu0
        %2032 = vdwg.mxu0
        %2033 = vmatprep.subr.mxu0 0.0
        %v2034 = vand.u32 %v1797, 4294901760
        %2035 = vmatpush1.msra.mxu0 %v2034
        %2036 = vmatprep.subr.mxu0 0.0
        %v2037 = vand.u32 %v1798, 4294901760
        %2038 = vmatpush1.msra.mxu0 %v2037
        %2039 = vmatprep.subr.mxu0 0.0
        %2040 = vmatpush1.msra.mxu0 0.0
        %2041 = vmatprep.subr.mxu0 0.0
        %2042 = vmatpush1.msra.mxu0 0.0
        %2043 = vmatprep.subr.mxu0 0.0
        %2044 = vmatpush1.msra.mxu0 0.0
        %2045 = vmatprep.subr.mxu0 0.0
        %2046 = vmatpush1.msra.mxu0 0.0
        %2047 = vmatprep.subr.mxu0 0.0
        %2048 = vmatpush1.msra.mxu0 0.0
        %2049 = vmatprep.subr.mxu0 0.0
        %2050 = vmatpush1.msra.mxu0 0.0
        %2051 = vmatprep.subr.mxu0 0.0
        %2052 = vmatpush1.msra.mxu0 0.0
        %2053 = vmatprep.subr.mxu0 0.0
        %2054 = vmatpush1.msra.mxu0 0.0
        %2055 = vmatprep.subr.mxu0 0.0
        %2056 = vmatpush1.msra.mxu0 0.0
        %2057 = vmatprep.subr.mxu0 0.0
        %2058 = vmatpush1.msra.mxu0 0.0
        %2059 = vmatprep.subr.mxu0 0.0
        %2060 = vmatpush1.msra.mxu0 0.0
        %2061 = vmatprep.subr.mxu0 0.0
        %2062 = vmatpush1.msra.mxu0 0.0
        %2063 = vmatprep.subr.mxu0 0.0
        %2064 = vmatpush1.msra.mxu0 0.0
        %2065 = vmatprep.subr.mxu0 0.0
        %2066 = vmatpush1.msra.mxu0 0.0
        %2067 = vmatprep.subr.mxu0 0.0
        %2068 = vmatpush1.msra.mxu0 0.0
        %2069 = vmatprep.subr.mxu0 0.0
        %2070 = vmatpush1.msra.mxu0 0.0
        %2071 = vmatprep.subr.mxu0 0.0
        %2072 = vmatpush1.msra.mxu0 0.0
        %2073 = vmatprep.subr.mxu0 0.0
        %2074 = vmatpush1.msra.mxu0 0.0
        %2075 = vmatprep.subr.mxu0 0.0
        %2076 = vmatpush1.msra.mxu0 0.0
        %2077 = vmatprep.subr.mxu0 0.0
        %2078 = vmatpush1.msra.mxu0 0.0
        %2079 = vmatprep.subr.mxu0 0.0
        %2080 = vmatpush1.msra.mxu0 0.0
        %2081 = vmatprep.subr.mxu0 0.0
        %2082 = vmatpush1.msra.mxu0 0.0
        %2083 = vmatprep.subr.mxu0 0.0
        %2084 = vmatpush1.msra.mxu0 0.0
        %2085 = vmatprep.subr.mxu0 0.0
        %2086 = vmatpush1.msra.mxu0 0.0
        %2087 = vmatprep.subr.mxu0 0.0
        %2088 = vmatpush1.msra.mxu0 0.0
        %2089 = vmatprep.subr.mxu0 0.0
        %2090 = vmatpush1.msra.mxu0 0.0
        %2091 = vmatprep.subr.mxu0 0.0
        %2092 = vmatpush1.msra.mxu0 0.0
        %2093 = vmatprep.subr.mxu0 0.0
        %2094 = vmatpush1.msra.mxu0 0.0
        %2095 = vmatprep.subr.mxu0 0.0
        %2096 = vmatpush1.msra.mxu0 0.0
        %2097 = vmatprep.subr.mxu0 0.0
        %2098 = vmatpush1.msra.mxu0 0.0
        %2099 = vmatprep.mubr.f32.mxu0 0.0
        %v2100 = vand.u32 %v632, 4294901760
        %v2101 = vsub.f32 %v632, %v2100
        %v2102 = vand.u32 %v2101, 4294901760
        %2103 = vmatmul.mubr.f32.gmra.mrb[0].mxu0 %v2102
        %v2104 = vpop.f32.mrb[0].mxu0
        %v2105 = vadd.f32 %v2030, %v2104
        %v2106 = vpop.f32.mrb[0].mxu0
        %2107 = vdwg.mxu0
        %2108 = vmatprep.subr.mxu0 0.0
        %v2109 = vand.u32 %v1797, 4294901760
        %v2110 = vsub.f32 %v1797, %v2109
        %v2111 = vand.u32 %v2110, 4294901760
        %2112 = vmatpush1.msra.mxu0 %v2111
        %2113 = vmatprep.subr.mxu0 0.0
        %v2114 = vand.u32 %v1798, 4294901760
        %v2115 = vsub.f32 %v1798, %v2114
        %v2116 = vand.u32 %v2115, 4294901760
        %2117 = vmatpush1.msra.mxu0 %v2116
        %2118 = vmatprep.subr.mxu0 0.0
        %2119 = vmatpush1.msra.mxu0 0.0
        %2120 = vmatprep.subr.mxu0 0.0
        %2121 = vmatpush1.msra.mxu0 0.0
        %2122 = vmatprep.subr.mxu0 0.0
        %2123 = vmatpush1.msra.mxu0 0.0
        %2124 = vmatprep.subr.mxu0 0.0
        %2125 = vmatpush1.msra.mxu0 0.0
        %2126 = vmatprep.subr.mxu0 0.0
        %2127 = vmatpush1.msra.mxu0 0.0
        %2128 = vmatprep.subr.mxu0 0.0
        %2129 = vmatpush1.msra.mxu0 0.0
        %2130 = vmatprep.subr.mxu0 0.0
        %2131 = vmatpush1.msra.mxu0 0.0
        %2132 = vmatprep.subr.mxu0 0.0
        %2133 = vmatpush1.msra.mxu0 0.0
        %2134 = vmatprep.subr.mxu0 0.0
        %2135 = vmatpush1.msra.mxu0 0.0
        %2136 = vmatprep.subr.mxu0 0.0
        %2137 = vmatpush1.msra.mxu0 0.0
        %2138 = vmatprep.subr.mxu0 0.0
        %2139 = vmatpush1.msra.mxu0 0.0
        %2140 = vmatprep.subr.mxu0 0.0
        %2141 = vmatpush1.msra.mxu0 0.0
        %2142 = vmatprep.subr.mxu0 0.0
        %2143 = vmatpush1.msra.mxu0 0.0
        %2144 = vmatprep.subr.mxu0 0.0
        %2145 = vmatpush1.msra.mxu0 0.0
        %2146 = vmatprep.subr.mxu0 0.0
        %2147 = vmatpush1.msra.mxu0 0.0
        %2148 = vmatprep.subr.mxu0 0.0
        %2149 = vmatpush1.msra.mxu0 0.0
        %2150 = vmatprep.subr.mxu0 0.0
        %2151 = vmatpush1.msra.mxu0 0.0
        %2152 = vmatprep.subr.mxu0 0.0
        %2153 = vmatpush1.msra.mxu0 0.0
        %2154 = vmatprep.subr.mxu0 0.0
        %2155 = vmatpush1.msra.mxu0 0.0
        %2156 = vmatprep.subr.mxu0 0.0
        %2157 = vmatpush1.msra.mxu0 0.0
        %2158 = vmatprep.subr.mxu0 0.0
        %2159 = vmatpush1.msra.mxu0 0.0
        %2160 = vmatprep.subr.mxu0 0.0
        %2161 = vmatpush1.msra.mxu0 0.0
        %2162 = vmatprep.subr.mxu0 0.0
        %2163 = vmatpush1.msra.mxu0 0.0
        %2164 = vmatprep.subr.mxu0 0.0
        %2165 = vmatpush1.msra.mxu0 0.0
        %2166 = vmatprep.subr.mxu0 0.0
        %2167 = vmatpush1.msra.mxu0 0.0
        %2168 = vmatprep.subr.mxu0 0.0
        %2169 = vmatpush1.msra.mxu0 0.0
        %2170 = vmatprep.subr.mxu0 0.0
        %2171 = vmatpush1.msra.mxu0 0.0
        %2172 = vmatprep.subr.mxu0 0.0
        %2173 = vmatpush1.msra.mxu0 0.0
        %2174 = vmatprep.subr.mxu0 0.0
        %2175 = vmatpush1.msra.mxu0 0.0
        %2176 = vmatprep.subr.mxu0 0.0
        %2177 = vmatpush1.msra.mxu0 0.0
        %2178 = vmatprep.mubr.f32.mxu0 0.0
        %v2179 = vand.u32 %v632, 4294901760
        %2180 = vmatmul.mubr.f32.gmra.mrb[0].mxu0 %v2179
        %v2181 = vpop.f32.mrb[0].mxu0
        %v2182 = vadd.f32 %v2105, %v2181
        %v2183 = vpop.f32.mrb[0].mxu0
        %2184 = vdwg.mxu0
        %2185 = vmatprep.subr.mxu0 0.0
        %v2186 = vand.u32 %v1797, 4294901760
        %2187 = vmatpush1.msra.mxu0 %v2186
        %2188 = vmatprep.subr.mxu0 0.0
        %v2189 = vand.u32 %v1798, 4294901760
        %2190 = vmatpush1.msra.mxu0 %v2189
        %2191 = vmatprep.subr.mxu0 0.0
        %2192 = vmatpush1.msra.mxu0 0.0
        %2193 = vmatprep.subr.mxu0 0.0
        %2194 = vmatpush1.msra.mxu0 0.0
        %2195 = vmatprep.subr.mxu0 0.0
        %2196 = vmatpush1.msra.mxu0 0.0
        %2197 = vmatprep.subr.mxu0 0.0
        %2198 = vmatpush1.msra.mxu0 0.0
        %2199 = vmatprep.subr.mxu0 0.0
        %2200 = vmatpush1.msra.mxu0 0.0
        %2201 = vmatprep.subr.mxu0 0.0
        %2202 = vmatpush1.msra.mxu0 0.0
        %2203 = vmatprep.subr.mxu0 0.0
        %2204 = vmatpush1.msra.mxu0 0.0
        %2205 = vmatprep.subr.mxu0 0.0
        %2206 = vmatpush1.msra.mxu0 0.0
        %2207 = vmatprep.subr.mxu0 0.0
        %2208 = vmatpush1.msra.mxu0 0.0
        %2209 = vmatprep.subr.mxu0 0.0
        %2210 = vmatpush1.msra.mxu0 0.0
        %2211 = vmatprep.subr.mxu0 0.0
        %2212 = vmatpush1.msra.mxu0 0.0
        %2213 = vmatprep.subr.mxu0 0.0
        %2214 = vmatpush1.msra.mxu0 0.0
        %2215 = vmatprep.subr.mxu0 0.0
        %2216 = vmatpush1.msra.mxu0 0.0
        %2217 = vmatprep.subr.mxu0 0.0
        %2218 = vmatpush1.msra.mxu0 0.0
        %2219 = vmatprep.subr.mxu0 0.0
        %2220 = vmatpush1.msra.mxu0 0.0
        %2221 = vmatprep.subr.mxu0 0.0
        %2222 = vmatpush1.msra.mxu0 0.0
        %2223 = vmatprep.subr.mxu0 0.0
        %2224 = vmatpush1.msra.mxu0 0.0
        %2225 = vmatprep.subr.mxu0 0.0
        %2226 = vmatpush1.msra.mxu0 0.0
        %2227 = vmatprep.subr.mxu0 0.0
        %2228 = vmatpush1.msra.mxu0 0.0
        %2229 = vmatprep.subr.mxu0 0.0
        %2230 = vmatpush1.msra.mxu0 0.0
        %2231 = vmatprep.subr.mxu0 0.0
        %2232 = vmatpush1.msra.mxu0 0.0
        %2233 = vmatprep.subr.mxu0 0.0
        %2234 = vmatpush1.msra.mxu0 0.0
        %2235 = vmatprep.subr.mxu0 0.0
        %2236 = vmatpush1.msra.mxu0 0.0
        %2237 = vmatprep.subr.mxu0 0.0
        %2238 = vmatpush1.msra.mxu0 0.0
        %2239 = vmatprep.subr.mxu0 0.0
        %2240 = vmatpush1.msra.mxu0 0.0
        %2241 = vmatprep.subr.mxu0 0.0
        %2242 = vmatpush1.msra.mxu0 0.0
        %2243 = vmatprep.subr.mxu0 0.0
        %2244 = vmatpush1.msra.mxu0 0.0
        %2245 = vmatprep.subr.mxu0 0.0
        %2246 = vmatpush1.msra.mxu0 0.0
        %2247 = vmatprep.subr.mxu0 0.0
        %2248 = vmatpush1.msra.mxu0 0.0
        %2249 = vmatprep.subr.mxu0 0.0
        %2250 = vmatpush1.msra.mxu0 0.0
        %2251 = vmatprep.mubr.f32.mxu0 0.0
        %v2252 = vand.u32 %v632, 4294901760
        %2253 = vmatmul.mubr.f32.gmra.mrb[0].mxu0 %v2252
        %v2254 = vpop.f32.mrb[0].mxu0
        %v2255 = vadd.f32 %v2182, %v2254
        %v2256 = vpop.f32.mrb[0].mxu0
        %2257 = vdwg.mxu0
        %v2258 = vmax.f32 %v2255, 0.0
        %v2260 = vsel %vm1101, %v2258, 0
        %2262 = vmatprep.subr.mxu0 0.0
        %v2263 = vand.u32 %v2260, 4294901760
        %2264 = vmatpush1.msra.mxu0 %v2263
        %2265 = vmatprep.subr.mxu0 0.0
        %2266 = vmatpush1.msra.mxu0 0.0
        %2267 = vmatprep.subr.mxu0 0.0
        %2268 = vmatpush1.msra.mxu0 0.0
        %2269 = vmatprep.subr.mxu0 0.0
        %2270 = vmatpush1.msra.mxu0 0.0
        %2271 = vmatprep.subr.mxu0 0.0
        %2272 = vmatpush1.msra.mxu0 0.0
        %2273 = vmatprep.subr.mxu0 0.0
        %2274 = vmatpush1.msra.mxu0 0.0
        %2275 = vmatprep.subr.mxu0 0.0
        %2276 = vmatpush1.msra.mxu0 0.0
        %2277 = vmatprep.subr.mxu0 0.0
        %2278 = vmatpush1.msra.mxu0 0.0
        %2279 = vmatprep.subr.mxu0 0.0
        %2280 = vmatpush1.msra.mxu0 0.0
        %2281 = vmatprep.subr.mxu0 0.0
        %2282 = vmatpush1.msra.mxu0 0.0
        %2283 = vmatprep.subr.mxu0 0.0
        %2284 = vmatpush1.msra.mxu0 0.0
        %2285 = vmatprep.subr.mxu0 0.0
        %2286 = vmatpush1.msra.mxu0 0.0
        %2287 = vmatprep.subr.mxu0 0.0
        %2288 = vmatpush1.msra.mxu0 0.0
        %2289 = vmatprep.subr.mxu0 0.0
        %2290 = vmatpush1.msra.mxu0 0.0
        %2291 = vmatprep.subr.mxu0 0.0
        %2292 = vmatpush1.msra.mxu0 0.0
        %2293 = vmatprep.subr.mxu0 0.0
        %2294 = vmatpush1.msra.mxu0 0.0
        %2295 = vmatprep.subr.mxu0 0.0
        %2296 = vmatpush1.msra.mxu0 0.0
        %2297 = vmatprep.subr.mxu0 0.0
        %2298 = vmatpush1.msra.mxu0 0.0
        %2299 = vmatprep.subr.mxu0 0.0
        %2300 = vmatpush1.msra.mxu0 0.0
        %2301 = vmatprep.subr.mxu0 0.0
        %2302 = vmatpush1.msra.mxu0 0.0
        %2303 = vmatprep.subr.mxu0 0.0
        %2304 = vmatpush1.msra.mxu0 0.0
        %2305 = vmatprep.subr.mxu0 0.0
        %2306 = vmatpush1.msra.mxu0 0.0
        %2307 = vmatprep.subr.mxu0 0.0
        %2308 = vmatpush1.msra.mxu0 0.0
        %2309 = vmatprep.subr.mxu0 0.0
        %2310 = vmatpush1.msra.mxu0 0.0
        %2311 = vmatprep.subr.mxu0 0.0
        %2312 = vmatpush1.msra.mxu0 0.0
        %2313 = vmatprep.subr.mxu0 0.0
        %2314 = vmatpush1.msra.mxu0 0.0
        %2315 = vmatprep.subr.mxu0 0.0
        %2316 = vmatpush1.msra.mxu0 0.0
        %2317 = vmatprep.subr.mxu0 0.0
        %2318 = vmatpush1.msra.mxu0 0.0
        %2319 = vmatprep.subr.mxu0 0.0
        %2320 = vmatpush1.msra.mxu0 0.0
        %2321 = vmatprep.subr.mxu0 0.0
        %2322 = vmatpush1.msra.mxu0 0.0
        %2323 = vmatprep.subr.mxu0 0.0
        %2324 = vmatpush1.msra.mxu0 0.0
        %2325 = vmatprep.subr.mxu0 0.0
        %2326 = vmatpush1.msra.mxu0 0.0
        %2327 = vmatprep.mubr.f32.mxu0 0.0
        %v2328 = vand.u32 %v1096, 4294901760
        %v2329 = vsub.f32 %v1096, %v2328
        %v2330 = vand.u32 %v2329, 4294901760
        %v2331 = vsub.f32 %v2329, %v2330
        %v2332 = vand.u32 %v2331, 4294901760
        %2333 = vmatmul.mubr.f32.gmra.mrb[0].mxu0 %v2332
        %v2334 = vpop.f32.mrb[0].mxu0
        %v2335 = vadd.f32 0.0, %v2334
        %v2336 = vpop.f32.mrb[0].mxu0
        %2337 = vmatprep.mubr.f32.mxu0 0.0
        %v2338 = vand.u32 %v1099, 4294901760
        %v2339 = vsub.f32 %v1099, %v2338
        %v2340 = vand.u32 %v2339, 4294901760
        %v2341 = vsub.f32 %v2339, %v2340
        %v2342 = vand.u32 %v2341, 4294901760
        %2343 = vmatmul.mubr.f32.gmra.mrb[0].mxu0 %v2342
        %v2344 = vpop.f32.mrb[0].mxu0
        %v2345 = vadd.f32 0.0, %v2344
        %v2346 = vpop.f32.mrb[0].mxu0
        %2347 = vdwg.mxu0
        %2348 = vmatprep.subr.mxu0 0.0
        %v2349 = vand.u32 %v2260, 4294901760
        %v2350 = vsub.f32 %v2260, %v2349
        %v2351 = vand.u32 %v2350, 4294901760
        %v2352 = vsub.f32 %v2350, %v2351
        %v2353 = vand.u32 %v2352, 4294901760
        %2354 = vmatpush1.msra.mxu0 %v2353
        %2355 = vmatprep.subr.mxu0 0.0
        %2356 = vmatpush1.msra.mxu0 0.0
        %2357 = vmatprep.subr.mxu0 0.0
        %2358 = vmatpush1.msra.mxu0 0.0
        %2359 = vmatprep.subr.mxu0 0.0
        %2360 = vmatpush1.msra.mxu0 0.0
        %2361 = vmatprep.subr.mxu0 0.0
        %2362 = vmatpush1.msra.mxu0 0.0
        %2363 = vmatprep.subr.mxu0 0.0
        %2364 = vmatpush1.msra.mxu0 0.0
        %2365 = vmatprep.subr.mxu0 0.0
        %2366 = vmatpush1.msra.mxu0 0.0
        %2367 = vmatprep.subr.mxu0 0.0
        %2368 = vmatpush1.msra.mxu0 0.0
        %2369 = vmatprep.subr.mxu0 0.0
        %2370 = vmatpush1.msra.mxu0 0.0
        %2371 = vmatprep.subr.mxu0 0.0
        %2372 = vmatpush1.msra.mxu0 0.0
        %2373 = vmatprep.subr.mxu0 0.0
        %2374 = vmatpush1.msra.mxu0 0.0
        %2375 = vmatprep.subr.mxu0 0.0
        %2376 = vmatpush1.msra.mxu0 0.0
        %2377 = vmatprep.subr.mxu0 0.0
        %2378 = vmatpush1.msra.mxu0 0.0
        %2379 = vmatprep.subr.mxu0 0.0
        %2380 = vmatpush1.msra.mxu0 0.0
        %2381 = vmatprep.subr.mxu0 0.0
        %2382 = vmatpush1.msra.mxu0 0.0
        %2383 = vmatprep.subr.mxu0 0.0
        %2384 = vmatpush1.msra.mxu0 0.0
        %2385 = vmatprep.subr.mxu0 0.0
        %2386 = vmatpush1.msra.mxu0 0.0
        %2387 = vmatprep.subr.mxu0 0.0
        %2388 = vmatpush1.msra.mxu0 0.0
        %2389 = vmatprep.subr.mxu0 0.0
        %2390 = vmatpush1.msra.mxu0 0.0
        %2391 = vmatprep.subr.mxu0 0.0
        %2392 = vmatpush1.msra.mxu0 0.0
        %2393 = vmatprep.subr.mxu0 0.0
        %2394 = vmatpush1.msra.mxu0 0.0
        %2395 = vmatprep.subr.mxu0 0.0
        %2396 = vmatpush1.msra.mxu0 0.0
        %2397 = vmatprep.subr.mxu0 0.0
        %2398 = vmatpush1.msra.mxu0 0.0
        %2399 = vmatprep.subr.mxu0 0.0
        %2400 = vmatpush1.msra.mxu0 0.0
        %2401 = vmatprep.subr.mxu0 0.0
        %2402 = vmatpush1.msra.mxu0 0.0
        %2403 = vmatprep.subr.mxu0 0.0
        %2404 = vmatpush1.msra.mxu0 0.0
        %2405 = vmatprep.subr.mxu0 0.0
        %2406 = vmatpush1.msra.mxu0 0.0
        %2407 = vmatprep.subr.mxu0 0.0
        %2408 = vmatpush1.msra.mxu0 0.0
        %2409 = vmatprep.subr.mxu0 0.0
        %2410 = vmatpush1.msra.mxu0 0.0
        %2411 = vmatprep.subr.mxu0 0.0
        %2412 = vmatpush1.msra.mxu0 0.0
        %2413 = vmatprep.subr.mxu0 0.0
        %2414 = vmatpush1.msra.mxu0 0.0
        %2415 = vmatprep.subr.mxu0 0.0
        %2416 = vmatpush1.msra.mxu0 0.0
        %2417 = vmatprep.mubr.f32.mxu0 0.0
        %v2418 = vand.u32 %v1096, 4294901760
        %2419 = vmatmul.mubr.f32.gmra.mrb[0].mxu0 %v2418
        %v2420 = vpop.f32.mrb[0].mxu0
        %v2421 = vadd.f32 %v2335, %v2420
        %v2422 = vpop.f32.mrb[0].mxu0
        %2423 = vmatprep.mubr.f32.mxu0 0.0
        %v2424 = vand.u32 %v1099, 4294901760
        %2425 = vmatmul.mubr.f32.gmra.mrb[0].mxu0 %v2424
        %v2426 = vpop.f32.mrb[0].mxu0
        %v2427 = vadd.f32 %v2345, %v2426
        %v2428 = vpop.f32.mrb[0].mxu0
        %2429 = vdwg.mxu0
        %2430 = vmatprep.subr.mxu0 0.0
        %v2431 = vand.u32 %v2260, 4294901760
        %v2432 = vsub.f32 %v2260, %v2431
        %2433 = vmatpush1.msra.mxu0 %v2432
        %2434 = vmatprep.subr.mxu0 0.0
        %2435 = vmatpush1.msra.mxu0 0.0
        %2436 = vmatprep.subr.mxu0 0.0
        %2437 = vmatpush1.msra.mxu0 0.0
        %2438 = vmatprep.subr.mxu0 0.0
        %2439 = vmatpush1.msra.mxu0 0.0
        %2440 = vmatprep.subr.mxu0 0.0
        %2441 = vmatpush1.msra.mxu0 0.0
        %2442 = vmatprep.subr.mxu0 0.0
        %2443 = vmatpush1.msra.mxu0 0.0
        %2444 = vmatprep.subr.mxu0 0.0
        %2445 = vmatpush1.msra.mxu0 0.0
        %2446 = vmatprep.subr.mxu0 0.0
        %2447 = vmatpush1.msra.mxu0 0.0
        %2448 = vmatprep.subr.mxu0 0.0
        %2449 = vmatpush1.msra.mxu0 0.0
        %2450 = vmatprep.subr.mxu0 0.0
        %2451 = vmatpush1.msra.mxu0 0.0
        %2452 = vmatprep.subr.mxu0 0.0
        %2453 = vmatpush1.msra.mxu0 0.0
        %2454 = vmatprep.subr.mxu0 0.0
        %2455 = vmatpush1.msra.mxu0 0.0
        %2456 = vmatprep.subr.mxu0 0.0
        %2457 = vmatpush1.msra.mxu0 0.0
        %2458 = vmatprep.subr.mxu0 0.0
        %2459 = vmatpush1.msra.mxu0 0.0
        %2460 = vmatprep.subr.mxu0 0.0
        %2461 = vmatpush1.msra.mxu0 0.0
        %2462 = vmatprep.subr.mxu0 0.0
        %2463 = vmatpush1.msra.mxu0 0.0
        %2464 = vmatprep.subr.mxu0 0.0
        %2465 = vmatpush1.msra.mxu0 0.0
        %2466 = vmatprep.subr.mxu0 0.0
        %2467 = vmatpush1.msra.mxu0 0.0
        %2468 = vmatprep.subr.mxu0 0.0
        %2469 = vmatpush1.msra.mxu0 0.0
        %2470 = vmatprep.subr.mxu0 0.0
        %2471 = vmatpush1.msra.mxu0 0.0
        %2472 = vmatprep.subr.mxu0 0.0
        %2473 = vmatpush1.msra.mxu0 0.0
        %2474 = vmatprep.subr.mxu0 0.0
        %2475 = vmatpush1.msra.mxu0 0.0
        %2476 = vmatprep.subr.mxu0 0.0
        %2477 = vmatpush1.msra.mxu0 0.0
        %2478 = vmatprep.subr.mxu0 0.0
        %2479 = vmatpush1.msra.mxu0 0.0
        %2480 = vmatprep.subr.mxu0 0.0
        %2481 = vmatpush1.msra.mxu0 0.0
        %2482 = vmatprep.subr.mxu0 0.0
        %2483 = vmatpush1.msra.mxu0 0.0
        %2484 = vmatprep.subr.mxu0 0.0
        %2485 = vmatpush1.msra.mxu0 0.0
        %2486 = vmatprep.subr.mxu0 0.0
        %2487 = vmatpush1.msra.mxu0 0.0
        %2488 = vmatprep.subr.mxu0 0.0
        %2489 = vmatpush1.msra.mxu0 0.0
        %2490 = vmatprep.subr.mxu0 0.0
        %2491 = vmatpush1.msra.mxu0 0.0
        %2492 = vmatprep.subr.mxu0 0.0
        %2493 = vmatpush1.msra.mxu0 0.0
        %2494 = vmatprep.subr.mxu0 0.0
        %2495 = vmatpush1.msra.mxu0 0.0
        %2496 = vmatprep.mubr.f32.mxu0 0.0
        %v2497 = vand.u32 %v1096, 4294901760
        %v2498 = vsub.f32 %v1096, %v2497
        %2499 = vmatmul.mubr.f32.gmra.mrb[0].mxu0 %v2498
        %v2500 = vpop.f32.mrb[0].mxu0
        %v2501 = vadd.f32 %v2421, %v2500
        %v2502 = vpop.f32.mrb[0].mxu0
        %2503 = vmatprep.mubr.f32.mxu0 0.0
        %v2504 = vand.u32 %v1099, 4294901760
        %v2505 = vsub.f32 %v1099, %v2504
        %2506 = vmatmul.mubr.f32.gmra.mrb[0].mxu0 %v2505
        %v2507 = vpop.f32.mrb[0].mxu0
        %v2508 = vadd.f32 %v2427, %v2507
        %v2509 = vpop.f32.mrb[0].mxu0
        %2510 = vdwg.mxu0
        %2511 = vmatprep.subr.mxu0 0.0
        %v2512 = vand.u32 %v2260, 4294901760
        %2513 = vmatpush1.msra.mxu0 %v2512
        %2514 = vmatprep.subr.mxu0 0.0
        %2515 = vmatpush1.msra.mxu0 0.0
        %2516 = vmatprep.subr.mxu0 0.0
        %2517 = vmatpush1.msra.mxu0 0.0
        %2518 = vmatprep.subr.mxu0 0.0
        %2519 = vmatpush1.msra.mxu0 0.0
        %2520 = vmatprep.subr.mxu0 0.0
        %2521 = vmatpush1.msra.mxu0 0.0
        %2522 = vmatprep.subr.mxu0 0.0
        %2523 = vmatpush1.msra.mxu0 0.0
        %2524 = vmatprep.subr.mxu0 0.0
        %2525 = vmatpush1.msra.mxu0 0.0
        %2526 = vmatprep.subr.mxu0 0.0
        %2527 = vmatpush1.msra.mxu0 0.0
        %2528 = vmatprep.subr.mxu0 0.0
        %2529 = vmatpush1.msra.mxu0 0.0
        %2530 = vmatprep.subr.mxu0 0.0
        %2531 = vmatpush1.msra.mxu0 0.0
        %2532 = vmatprep.subr.mxu0 0.0
        %2533 = vmatpush1.msra.mxu0 0.0
        %2534 = vmatprep.subr.mxu0 0.0
        %2535 = vmatpush1.msra.mxu0 0.0
        %2536 = vmatprep.subr.mxu0 0.0
        %2537 = vmatpush1.msra.mxu0 0.0
        %2538 = vmatprep.subr.mxu0 0.0
        %2539 = vmatpush1.msra.mxu0 0.0
        %2540 = vmatprep.subr.mxu0 0.0
        %2541 = vmatpush1.msra.mxu0 0.0
        %2542 = vmatprep.subr.mxu0 0.0
        %2543 = vmatpush1.msra.mxu0 0.0
        %2544 = vmatprep.subr.mxu0 0.0
        %2545 = vmatpush1.msra.mxu0 0.0
        %2546 = vmatprep.subr.mxu0 0.0
        %2547 = vmatpush1.msra.mxu0 0.0
        %2548 = vmatprep.subr.mxu0 0.0
        %2549 = vmatpush1.msra.mxu0 0.0
        %2550 = vmatprep.subr.mxu0 0.0
        %2551 = vmatpush1.msra.mxu0 0.0
        %2552 = vmatprep.subr.mxu0 0.0
        %2553 = vmatpush1.msra.mxu0 0.0
        %2554 = vmatprep.subr.mxu0 0.0
        %2555 = vmatpush1.msra.mxu0 0.0
        %2556 = vmatprep.subr.mxu0 0.0
        %2557 = vmatpush1.msra.mxu0 0.0
        %2558 = vmatprep.subr.mxu0 0.0
        %2559 = vmatpush1.msra.mxu0 0.0
        %2560 = vmatprep.subr.mxu0 0.0
        %2561 = vmatpush1.msra.mxu0 0.0
        %2562 = vmatprep.subr.mxu0 0.0
        %2563 = vmatpush1.msra.mxu0 0.0
        %2564 = vmatprep.subr.mxu0 0.0
        %2565 = vmatpush1.msra.mxu0 0.0
        %2566 = vmatprep.subr.mxu0 0.0
        %2567 = vmatpush1.msra.mxu0 0.0
        %2568 = vmatprep.subr.mxu0 0.0
        %2569 = vmatpush1.msra.mxu0 0.0
        %2570 = vmatprep.subr.mxu0 0.0
        %2571 = vmatpush1.msra.mxu0 0.0
        %2572 = vmatprep.subr.mxu0 0.0
        %2573 = vmatpush1.msra.mxu0 0.0
        %2574 = vmatprep.subr.mxu0 0.0
        %2575 = vmatpush1.msra.mxu0 0.0
        %2576 = vmatprep.mubr.f32.mxu0 0.0
        %v2577 = vand.u32 %v1096, 4294901760
        %v2578 = vsub.f32 %v1096, %v2577
        %v2579 = vand.u32 %v2578, 4294901760
        %2580 = vmatmul.mubr.f32.gmra.mrb[0].mxu0 %v2579
        %v2581 = vpop.f32.mrb[0].mxu0
        %v2582 = vadd.f32 %v2501, %v2581
        %v2583 = vpop.f32.mrb[0].mxu0
        %2584 = vmatprep.mubr.f32.mxu0 0.0
        %v2585 = vand.u32 %v1099, 4294901760
        %v2586 = vsub.f32 %v1099, %v2585
        %v2587 = vand.u32 %v2586, 4294901760
        %2588 = vmatmul.mubr.f32.gmra.mrb[0].mxu0 %v2587
        %v2589 = vpop.f32.mrb[0].mxu0
        %v2590 = vadd.f32 %v2508, %v2589
        %v2591 = vpop.f32.mrb[0].mxu0
        %2592 = vdwg.mxu0
        %2593 = vmatprep.subr.mxu0 0.0
        %v2594 = vand.u32 %v2260, 4294901760
        %v2595 = vsub.f32 %v2260, %v2594
        %v2596 = vand.u32 %v2595, 4294901760
        %2597 = vmatpush1.msra.mxu0 %v2596
        %2598 = vmatprep.subr.mxu0 0.0
        %2599 = vmatpush1.msra.mxu0 0.0
        %2600 = vmatprep.subr.mxu0 0.0
        %2601 = vmatpush1.msra.mxu0 0.0
        %2602 = vmatprep.subr.mxu0 0.0
        %2603 = vmatpush1.msra.mxu0 0.0
        %2604 = vmatprep.subr.mxu0 0.0
        %2605 = vmatpush1.msra.mxu0 0.0
        %2606 = vmatprep.subr.mxu0 0.0
        %2607 = vmatpush1.msra.mxu0 0.0
        %2608 = vmatprep.subr.mxu0 0.0
        %2609 = vmatpush1.msra.mxu0 0.0
        %2610 = vmatprep.subr.mxu0 0.0
        %2611 = vmatpush1.msra.mxu0 0.0
        %2612 = vmatprep.subr.mxu0 0.0
        %2613 = vmatpush1.msra.mxu0 0.0
        %2614 = vmatprep.subr.mxu0 0.0
        %2615 = vmatpush1.msra.mxu0 0.0
        %2616 = vmatprep.subr.mxu0 0.0
        %2617 = vmatpush1.msra.mxu0 0.0
        %2618 = vmatprep.subr.mxu0 0.0
        %2619 = vmatpush1.msra.mxu0 0.0
        %2620 = vmatprep.subr.mxu0 0.0
        %2621 = vmatpush1.msra.mxu0 0.0
        %2622 = vmatprep.subr.mxu0 0.0
        %2623 = vmatpush1.msra.mxu0 0.0
        %2624 = vmatprep.subr.mxu0 0.0
        %2625 = vmatpush1.msra.mxu0 0.0
        %2626 = vmatprep.subr.mxu0 0.0
        %2627 = vmatpush1.msra.mxu0 0.0
        %2628 = vmatprep.subr.mxu0 0.0
        %2629 = vmatpush1.msra.mxu0 0.0
        %2630 = vmatprep.subr.mxu0 0.0
        %2631 = vmatpush1.msra.mxu0 0.0
        %2632 = vmatprep.subr.mxu0 0.0
        %2633 = vmatpush1.msra.mxu0 0.0
        %2634 = vmatprep.subr.mxu0 0.0
        %2635 = vmatpush1.msra.mxu0 0.0
        %2636 = vmatprep.subr.mxu0 0.0
        %2637 = vmatpush1.msra.mxu0 0.0
        %2638 = vmatprep.subr.mxu0 0.0
        %2639 = vmatpush1.msra.mxu0 0.0
        %2640 = vmatprep.subr.mxu0 0.0
        %2641 = vmatpush1.msra.mxu0 0.0
        %2642 = vmatprep.subr.mxu0 0.0
        %2643 = vmatpush1.msra.mxu0 0.0
        %2644 = vmatprep.subr.mxu0 0.0
        %2645 = vmatpush1.msra.mxu0 0.0
        %2646 = vmatprep.subr.mxu0 0.0
        %2647 = vmatpush1.msra.mxu0 0.0
        %2648 = vmatprep.subr.mxu0 0.0
        %2649 = vmatpush1.msra.mxu0 0.0
        %2650 = vmatprep.subr.mxu0 0.0
        %2651 = vmatpush1.msra.mxu0 0.0
        %2652 = vmatprep.subr.mxu0 0.0
        %2653 = vmatpush1.msra.mxu0 0.0
        %2654 = vmatprep.subr.mxu0 0.0
        %2655 = vmatpush1.msra.mxu0 0.0
        %2656 = vmatprep.subr.mxu0 0.0
        %2657 = vmatpush1.msra.mxu0 0.0
        %2658 = vmatprep.subr.mxu0 0.0
        %2659 = vmatpush1.msra.mxu0 0.0
        %2660 = vmatprep.mubr.f32.mxu0 0.0
        %v2661 = vand.u32 %v1096, 4294901760
        %2662 = vmatmul.mubr.f32.gmra.mrb[0].mxu0 %v2661
        %v2663 = vpop.f32.mrb[0].mxu0
        %v2664 = vadd.f32 %v2582, %v2663
        %v2665 = vpop.f32.mrb[0].mxu0
        %2666 = vmatprep.mubr.f32.mxu0 0.0
        %v2667 = vand.u32 %v1099, 4294901760
        %2668 = vmatmul.mubr.f32.gmra.mrb[0].mxu0 %v2667
        %v2669 = vpop.f32.mrb[0].mxu0
        %v2670 = vadd.f32 %v2590, %v2669
        %v2671 = vpop.f32.mrb[0].mxu0
        %2672 = vdwg.mxu0
        %2673 = vmatprep.subr.mxu0 0.0
        %v2674 = vand.u32 %v2260, 4294901760
        %2675 = vmatpush1.msra.mxu0 %v2674
        %2676 = vmatprep.subr.mxu0 0.0
        %2677 = vmatpush1.msra.mxu0 0.0
        %2678 = vmatprep.subr.mxu0 0.0
        %2679 = vmatpush1.msra.mxu0 0.0
        %2680 = vmatprep.subr.mxu0 0.0
        %2681 = vmatpush1.msra.mxu0 0.0
        %2682 = vmatprep.subr.mxu0 0.0
        %2683 = vmatpush1.msra.mxu0 0.0
        %2684 = vmatprep.subr.mxu0 0.0
        %2685 = vmatpush1.msra.mxu0 0.0
        %2686 = vmatprep.subr.mxu0 0.0
        %2687 = vmatpush1.msra.mxu0 0.0
        %2688 = vmatprep.subr.mxu0 0.0
        %2689 = vmatpush1.msra.mxu0 0.0
        %2690 = vmatprep.subr.mxu0 0.0
        %2691 = vmatpush1.msra.mxu0 0.0
        %2692 = vmatprep.subr.mxu0 0.0
        %2693 = vmatpush1.msra.mxu0 0.0
        %2694 = vmatprep.subr.mxu0 0.0
        %2695 = vmatpush1.msra.mxu0 0.0
        %2696 = vmatprep.subr.mxu0 0.0
        %2697 = vmatpush1.msra.mxu0 0.0
        %2698 = vmatprep.subr.mxu0 0.0
        %2699 = vmatpush1.msra.mxu0 0.0
        %2700 = vmatprep.subr.mxu0 0.0
        %2701 = vmatpush1.msra.mxu0 0.0
        %2702 = vmatprep.subr.mxu0 0.0
        %2703 = vmatpush1.msra.mxu0 0.0
        %2704 = vmatprep.subr.mxu0 0.0
        %2705 = vmatpush1.msra.mxu0 0.0
        %2706 = vmatprep.subr.mxu0 0.0
        %2707 = vmatpush1.msra.mxu0 0.0
        %2708 = vmatprep.subr.mxu0 0.0
        %2709 = vmatpush1.msra.mxu0 0.0
        %2710 = vmatprep.subr.mxu0 0.0
        %2711 = vmatpush1.msra.mxu0 0.0
        %2712 = vmatprep.subr.mxu0 0.0
        %2713 = vmatpush1.msra.mxu0 0.0
        %2714 = vmatprep.subr.mxu0 0.0
        %2715 = vmatpush1.msra.mxu0 0.0
        %2716 = vmatprep.subr.mxu0 0.0
        %2717 = vmatpush1.msra.mxu0 0.0
        %2718 = vmatprep.subr.mxu0 0.0
        %2719 = vmatpush1.msra.mxu0 0.0
        %2720 = vmatprep.subr.mxu0 0.0
        %2721 = vmatpush1.msra.mxu0 0.0
        %2722 = vmatprep.subr.mxu0 0.0
        %2723 = vmatpush1.msra.mxu0 0.0
        %2724 = vmatprep.subr.mxu0 0.0
        %2725 = vmatpush1.msra.mxu0 0.0
        %2726 = vmatprep.subr.mxu0 0.0
        %2727 = vmatpush1.msra.mxu0 0.0
        %2728 = vmatprep.subr.mxu0 0.0
        %2729 = vmatpush1.msra.mxu0 0.0
        %2730 = vmatprep.subr.mxu0 0.0
        %2731 = vmatpush1.msra.mxu0 0.0
        %2732 = vmatprep.subr.mxu0 0.0
        %2733 = vmatpush1.msra.mxu0 0.0
        %2734 = vmatprep.subr.mxu0 0.0
        %2735 = vmatpush1.msra.mxu0 0.0
        %2736 = vmatprep.subr.mxu0 0.0
        %2737 = vmatpush1.msra.mxu0 0.0
        %2738 = vmatprep.mubr.f32.mxu0 0.0
        %v2739 = vand.u32 %v1096, 4294901760
        %2740 = vmatmul.mubr.f32.gmra.mrb[0].mxu0 %v2739
        %v2741 = vpop.f32.mrb[0].mxu0
        %v2742 = vadd.f32 %v2664, %v2741
        %v2743 = vpop.f32.mrb[0].mxu0
        %2744 = vmatprep.mubr.f32.mxu0 0.0
        %v2745 = vand.u32 %v1099, 4294901760
        %2746 = vmatmul.mubr.f32.gmra.mrb[0].mxu0 %v2745
        %v2747 = vpop.f32.mrb[0].mxu0
        %v2748 = vadd.f32 %v2670, %v2747
        %v2749 = vpop.f32.mrb[0].mxu0
        %2750 = vdwg.mxu0
        %v2751 = vxor.u32 %v2742, 2147483648
        %v2752 = vxor.u32 %v2748, 2147483648
        %v2753 = vmul.f32 %v2751, 1.442695
        %v2754 = vpow.pop %v2753
        %v2755 = vmul.f32 %v2752, 1.442695
        %v2756 = vpow.pop %v2755
        %v2757 = vadd.f32 %v2754, 1.0
        %v2758 = vadd.f32 %v2756, 1.0
        %v2759 = vrcp.pop %v2757
        %v2760 = vmul.f32 1.0, %v2759
        %v2761 = vrcp.pop %v2758
        %v2762 = vmul.f32 1.0, %v2761
        %2764 = vset.pattern.permute.xlu0 0
        %2765 = vperm.xlu0 %2764, %v2760
        %v2766 = vpop.permute.xlu0 %2765
        %2769 = vset.pattern.permute.xlu0 0
        %2770 = vperm.xlu0 %2769, %v2762
        %v2771 = vpop.permute.xlu0 %2770
        %v2773 = vmul.f32 %v1787, %v2766
        %v2774 = vmul.f32 %v1788, %v2766
        %v2775 = vmul.f32 %v1789, %v2771
        %v2776 = vmul.f32 %v1790, %v2771
        %v2777 = vadd.f32 %v2773, %v1629
        %v2778 = vadd.f32 %v2774, %v1630
        %v2779 = vadd.f32 %v2775, %v1631
        %v2780 = vadd.f32 %v2776, %v1632
        %s2781 = scalar_lea.vmem %s351, 32 [#allocation5]
        %2782 = vst [vmem:[%s2781] sm:$0xff] %v2777
        %2783 = vst [vmem:[%s2781 + $0x8] sm:$0xff] %v2778
        %2784 = vst [vmem:[%s2781 + $0x10] sm:$0xff] %v2779
        %2785 = vst [vmem:[%s2781 + $0x18] sm:$0xff] %v2780
        %s2786 = sand.u32 %s228, 1
        %s2787 = scalar_lea.sflag [#allocation4], %s2786
        %s2788 = sand.u32 %s228, 1
        %s2789 = smul.addr %s2788, 64
        %s2790 = scalar_lea.vmem [#allocation5], %s2789
        // Predicated region
        $region61: #{tpu_custom_call.1} parent=55 // pred_check
          %p2791 = pneg %p238
        $region62: #{tpu_custom_call.1} parent=55 // pred_check_branch
          %2793 = sbr.rel (%p2791) target = $region64
        $region63: #{tpu_custom_call.1} parent=55 // pred_region
          %s2794 = smul.u32 2, %s26
          %s2796 = ssub.s32 1024, 1024
          %2797 = vsyncadd %s2787, %s2796
          %s2798 = smul.addr %s2794, 4
          %s2799 = smul.addr %s2798, 128
          %s2800 = scalar_lea.hbm %s9, %s2799
          %s2801 = sshll.u32 %s2790, 4
          %s2802 = int_to_ptr.vmem [resolvable:$true] %s2801
          %2807 = dma.vmem_to_hbm [thread:$0]  %s2802, 1024, %s2800, %s2787, 256, 256, 16
        $region64: #{tpu_custom_call.1} parent=55 // pred_fallthru
          _
      $region56: #{tpu_custom_call.1} parent=5 // pred_fallthru
        _
      %p2808 = scmp.le.s32.totalorder 2, %s21
      // Predicated region
      $region65: #{tpu_custom_call.1} parent=5 // pred_check
        %p2809 = pneg %p2808
      $region66: #{tpu_custom_call.1} parent=5 // pred_check_branch
        %2811 = sbr.rel (%p2809) target = $region68
      $region67: #{tpu_custom_call.1} parent=5 // pred_region
        %s2812 = ssub.s32 %s21, 2
        // Predicated region
        $region69: #{tpu_custom_call.1} parent=67 // pred_check
          %p2813 = pneg %p244
        $region70: #{tpu_custom_call.1} parent=67 // pred_check_branch
          %2815 = sbr.rel (%p2813) target = $region72
        $region71: #{tpu_custom_call.1} parent=67 // pred_region
          %s2816 = sand.u32 %s229, 1
          %s2817 = scalar_lea.sflag [#allocation4], %s2816
          %s2818 = sand.u32 %s229, 1
          %s2819 = smul.addr %s2818, 64
          %s2820 = scalar_lea.vmem [#allocation5], %s2819
          %2821 = dma.done %s2817, 1024
        $region72: #{tpu_custom_call.1} parent=67 // pred_fallthru
          _
      $region68: #{tpu_custom_call.1} parent=5 // pred_fallthru
        _
    $region6: #{tpu_custom_call.1} parent=1 // loop_footer
      %s25 = sadd.s32 1, %s21
    $region7: #{tpu_custom_call.1} parent=1 // loop_footer_branch
      %20 = sbr.rel target = $region3
    $region8: #{tpu_custom_call.1} parent=1 // loop_exit
      _
    %2822 = vsyncpa [#allocation3], 1
    %s2823 = scalar_lea.sflag [#allocation3], 1
    %2824 = vsyncpa %s2823, 1
    %2825 = vsyncpa [#allocation4], 1
    %s2826 = scalar_lea.sflag [#allocation4], 1
    %2827 = vsyncpa %s2826, 1

</llo_original>
